<compile_context>
chip_gen: v7x
topology: tpu7x:2x2x1
jax: 0.10.0
libtpu: 0.0.40
codegen_flags: <defaults>
</compile_context>

<pallas_src>
import functools

import numpy as np
import jax
import jax.numpy as jnp
from jax.experimental import pallas as pl
from jax.experimental.pallas import tpu as pltpu

LANES = 128  # one vreg lane width; all feature dims are padded to this


def _round_up(v, m):
    return (v + m - 1) // m * m


def _pad2(a, rows, cols):
    a = jnp.asarray(a, jnp.float32)
    return jnp.pad(a, ((0, rows - a.shape[0]), (0, cols - a.shape[1])))


# --------------------------------------------------------------------------- kernel

def _bmp_kernel(src_ref, dst_ref, rev_ref,                 # scalar prefetch (SMEM)
                x_ref, ea_ref, deg_ref,                     # VMEM inputs
                wix_ref, wie_ref, bi_ref,                   # W_i (split) + b_i
                wh_ref, bh_ref,                             # W_h + b_h
                wox_ref, wom_ref, bo_ref,                   # W_o (split) + b_o
                out_ref,                                    # VMEM output
                h_scr, h0_scr, m_scr, mall_scr,             # VMEM scratch
                *, n_edges, depth):
    f32 = jnp.float32
    bf16 = jnp.bfloat16

    # clear the staging buffer so padded edge rows never hold garbage
    m_scr[...] = jnp.zeros_like(m_scr)

    # ---- H_0 = W_i(cat([x[edge_index[0]], edge_attr])) ----------------------
    # gather x[src] into m_scr (reused as staging) with dynamic row copies
    @pl.loop(0, n_edges)
    def _(e):
        s = src_ref[e]
        m_scr[pl.ds(e, 1), :] = x_ref[pl.ds(s, 1), :]

    h0 = (jnp.dot(m_scr[...].astype(bf16), wix_ref[...],
                  preferred_element_type=f32)
          + jnp.dot(ea_ref[...].astype(bf16), wie_ref[...],
                    preferred_element_type=f32)
          + bi_ref[...])
    h0_scr[...] = h0
    h_scr[...] = jnp.maximum(h0, 0.0)            # H = relu(H_0)

    # ---- depth-1 message passing steps; H / H_0 stay resident in VMEM -------
    for _step in range(1, depth):
        # M_all[n] = sum_{e : dst[e] == n} H[e]   (index-based segment sum)
        mall_scr[...] = jnp.zeros_like(mall_scr)

        @pl.loop(0, n_edges)
        def _(e):
            d = dst_ref[e]
            mall_scr[pl.ds(d, 1), :] = (mall_scr[pl.ds(d, 1), :]
                                        + h_scr[pl.ds(e, 1), :])

        # M[e] = M_all[src[e]] - H[rev[e]]   (rev < 0 => no reverse edge => -0)
        @pl.loop(0, n_edges)
        def _(e):
            s = src_ref[e]
            r = rev_ref[e]
            valid = (r >= 0).astype(f32)
            r_safe = jnp.maximum(r, 0)
            m_scr[pl.ds(e, 1), :] = (mall_scr[pl.ds(s, 1), :]
                                     - valid * h_scr[pl.ds(r_safe, 1), :])

        # H = relu(H_0 + W_h(M))      (dropout: eval-mode identity)
        h_t = jnp.dot(m_scr[...].astype(bf16), wh_ref[...],
                      preferred_element_type=f32) + bh_ref[...]
        h_scr[...] = jnp.maximum(h0_scr[...] + h_t, 0.0)

    # ---- readout: M = segment_sum(H, dst); isolated nodes fall back to x ----
    mall_scr[...] = jnp.zeros_like(mall_scr)

    @pl.loop(0, n_edges)
    def _(e):
        d = dst_ref[e]
        mall_scr[pl.ds(d, 1), :] = (mall_scr[pl.ds(d, 1), :]
                                    + h_scr[pl.ds(e, 1), :])

    x = x_ref[...]
    has_in = (deg_ref[...] > 0.0).astype(f32)          # (N, 1) in-degree mask
    m = mall_scr[...] * has_in + x * (1.0 - has_in)

    # out = relu(W_o(cat([x, M])))   (concat folded into a split matmul)
    y = (jnp.dot(x.astype(bf16), wox_ref[...], preferred_element_type=f32)
         + jnp.dot(m.astype(bf16), wom_ref[...], preferred_element_type=f32)
         + bo_ref[...])
    out_ref[...] = jnp.maximum(y, 0.0)                 # dropout: identity (eval)


# --------------------------------------------------------------------------- wrapper

def prepare_params(params, node_features, fp=LANES):
    """Hoisted once: split the concat-projections, transpose, pad to the lane
    width and cast matmul operands to bf16 (biases stay f32)."""
    Wi, Wh, Wo = params["W_i"], params["W_h"], params["W_o"]
    bf16 = jnp.bfloat16
    return dict(
        wix_t=_pad2(Wi[:, :node_features].T, fp, fp).astype(bf16),
        wie_t=_pad2(Wi[:, node_features:].T, fp, fp).astype(bf16),
        wh_t=_pad2(Wh.T, fp, fp).astype(bf16),
        wox_t=_pad2(Wo[:, :node_features].T, fp, fp).astype(bf16),
        wom_t=_pad2(Wo[:, node_features:].T, fp, fp).astype(bf16),
        bi=_pad2(params["b_i"][None, :], 1, fp),
        bh=_pad2(params["b_h"][None, :], 1, fp),
        bo=_pad2(params["b_o"][None, :], 1, fp),
    )


def bond_message_passing(params, x, edge_attr, edge_index, rev_edge_index, depth=5):
    N, Dn = x.shape
    E, Db = edge_attr.shape
    H = params["W_i"].shape[0]
    FP = LANES
    assert Dn <= FP and Db <= FP and H <= FP, "single 128-lane tile assumed here"
    # The x-fallback for nodes with no incoming edges (torch.where broadcast)
    # implicitly requires node_features == hidden_size, as in the PyTorch module.
    assert Dn == H

    n_pad = _round_up(N, 8)
    e_pad = _round_up(max(E, 1), 8)

    x_p = _pad2(x, n_pad, FP)
    ea_p = _pad2(edge_attr, e_pad, FP)

    src = jnp.asarray(edge_index[0], jnp.int32)
    dst = jnp.asarray(edge_index[1], jnp.int32)
    rev = jnp.asarray(rev_edge_index, jnp.int32)
    deg = jnp.zeros((n_pad, 1), jnp.float32).at[dst, 0].add(1.0)   # in-degree

    w = prepare_params(params, Dn, FP)

    def full(shape):
        # full-array block; index_map also receives the scalar-prefetch refs
        return pl.BlockSpec(shape, lambda i, *prefetch: (0,) * len(shape))

    grid_spec = pltpu.PrefetchScalarGridSpec(
        num_scalar_prefetch=3,                  # src, dst, rev  -> SMEM
        grid=(1,),
        in_specs=[
            full((n_pad, FP)),                  # x (padded)
            full((e_pad, FP)),                  # edge_attr (padded)
            full((n_pad, 1)),                   # in-degree mask
            full((FP, FP)), full((FP, FP)), full((1, FP)),   # W_i split + b_i
            full((FP, FP)), full((1, FP)),                   # W_h + b_h
            full((FP, FP)), full((FP, FP)), full((1, FP)),   # W_o split + b_o
        ],
        out_specs=full((n_pad, FP)),
        scratch_shapes=[
            pltpu.VMEM((e_pad, FP), jnp.float32),   # H
            pltpu.VMEM((e_pad, FP), jnp.float32),   # H_0
            pltpu.VMEM((e_pad, FP), jnp.float32),   # M / gathered-x staging
            pltpu.VMEM((n_pad, FP), jnp.float32),   # per-node segment sum
        ],
    )

    out = pl.pallas_call(
        functools.partial(_bmp_kernel, n_edges=E, depth=depth),
        out_shape=jax.ShapeDtypeStruct((n_pad, FP), jnp.float32),
        grid_spec=grid_spec,
        compiler_params=pltpu.CompilerParams(
            dimension_semantics=("arbitrary",),
            vmem_limit_bytes=32 * 1024 * 1024,
        ),
    )(src, dst, rev,
      x_p, ea_p, deg,
      w["wix_t"], w["wie_t"], w["bi"],
      w["wh_t"], w["bh"],
      w["wox_t"], w["wom_t"], w["bo"])

    return out[:N, :H]


# --------------------------------------------------------------------------- reference

def bmp_reference(params, x, edge_attr, edge_index, rev_edge_index, depth=5):
    """Pure-JAX f32 reference, faithful to the PyTorch forward (eval mode)."""
    src, dst = edge_index[0], edge_index[1]
    N = x.shape[0]
    h0 = (jnp.concatenate([x[src], edge_attr], axis=1) @ params["W_i"].T
          + params["b_i"])
    h = jnp.maximum(h0, 0.0)
    for _ in range(1, depth):
        m_all = jax.ops.segment_sum(h, dst, num_segments=N)
        m = m_all[src] - h[rev_edge_index]
        h = jnp.maximum(h0 + m @ params["W_h"].T + params["b_h"], 0.0)
    m = jax.ops.segment_sum(h, dst, num_segments=N)
    m = jnp.where(jnp.sum(m, axis=1, keepdims=True) == 0.0, x, m)
    out = jnp.concatenate([x, m], axis=1) @ params["W_o"].T + params["b_o"]
    return jnp.maximum(out, 0.0)


def init_params(key, node_features, bond_features, hidden_size):
    def lin(k, out_d, in_d):
        kw, kb = jax.random.split(k)
        w = (0.05 * jax.random.normal(kw, (out_d, in_d))).astype(jnp.float32)
        b = (0.01 * jax.random.normal(kb, (out_d,))).astype(jnp.float32)
        return w, b
    k1, k2, k3 = jax.random.split(key, 3)
    Wi, bi = lin(k1, hidden_size, node_features + bond_features)
    Wh, bh = lin(k2, hidden_size, hidden_size)
    Wo, bo = lin(k3, hidden_size, node_features + hidden_size)
    return {"W_i": Wi, "b_i": bi, "W_h": Wh, "b_h": bh, "W_o": Wo, "b_o": bo}


# --------------------------------------------------------------------------- main

if __name__ == "__main__":
    node_features = hidden_size = 32      # x-fallback in the readout requires equality
    bond_features = 16
    depth = 5                             # module default

    key = jax.random.PRNGKey(0)
    k_p, k_x, k_e = jax.random.split(key, 3)
    params = init_params(k_p, node_features, bond_features, hidden_size)

    # small molecule-like graph: chain 0-1-2-3-4-5-6 of bidirectional bonds,
    # node 7 isolated (exercises the "no incoming edge -> x" readout path).
    N = 8
    pairs = [(0, 1), (1, 2), (2, 3), (3, 4), (4, 5), (5, 6)]
    edges = []
    for u, v in pairs:
        edges.append((u, v))
        edges.append((v, u))
    edge_index = np.asarray(edges, dtype=np.int32).T           # (2, 12)
    E = edge_index.shape[1]
    rev_edge_index = np.asarray(
        [i + 1 if i % 2 == 0 else i - 1 for i in range(E)], dtype=np.int32)

    x = jax.random.normal(k_x, (N, node_features), dtype=jnp.float32)
    edge_attr = jax.random.normal(k_e, (E, bond_features), dtype=jnp.float32)

    out = bond_message_passing(params, x, edge_attr, edge_index,
                               rev_edge_index, depth=depth)
    out = jax.block_until_ready(out)

    ref = bmp_reference(params, x, edge_attr, edge_index, rev_edge_index, depth)
    assert out.shape == (N, hidden_size)
    np.testing.assert_allclose(np.asarray(out), np.asarray(ref),
                               rtol=5e-2, atol=5e-2)
    print("KERNEL_OK")
</pallas_src>

<mosaic_0001>
module attributes {stable_mosaic.version = 11 : i64} {
  func.func @_bmp_kernel(%arg0: i32, %arg1: memref<12xi32, #tpu.memory_space<smem>>, %arg2: memref<12xi32, #tpu.memory_space<smem>>, %arg3: memref<12xi32, #tpu.memory_space<smem>>, %arg4: memref<8x128xf32, #tpu.memory_space<vmem>>, %arg5: memref<16x128xf32, #tpu.memory_space<vmem>>, %arg6: memref<8x1xf32, #tpu.memory_space<vmem>>, %arg7: memref<128x128xbf16, #tpu.memory_space<vmem>>, %arg8: memref<128x128xbf16, #tpu.memory_space<vmem>>, %arg9: memref<1x128xf32, #tpu.memory_space<vmem>>, %arg10: memref<128x128xbf16, #tpu.memory_space<vmem>>, %arg11: memref<1x128xf32, #tpu.memory_space<vmem>>, %arg12: memref<128x128xbf16, #tpu.memory_space<vmem>>, %arg13: memref<128x128xbf16, #tpu.memory_space<vmem>>, %arg14: memref<1x128xf32, #tpu.memory_space<vmem>>, %arg15: memref<8x128xf32, #tpu.memory_space<vmem>>, %arg16: memref<16x128xf32, #tpu.memory_space<vmem>>, %arg17: memref<16x128xf32, #tpu.memory_space<vmem>>, %arg18: memref<16x128xf32, #tpu.memory_space<vmem>>, %arg19: memref<8x128xf32, #tpu.memory_space<vmem>>) attributes {dimension_semantics = [#tpu.dimension_semantics<arbitrary>], iteration_bounds = array<i64: 1>, scalar_prefetch = 3 : i64, scratch_operands = 4 : i64, tpu.core_type = #tpu.core_type<tc>, window_params = [{pipeline_mode = #tpu.pipeline_mode<synchronous>, transform_indices = @transform_0, window_bounds = array<i64: 8, 128>}, {pipeline_mode = #tpu.pipeline_mode<synchronous>, transform_indices = @transform_1, window_bounds = array<i64: 16, 128>}, {pipeline_mode = #tpu.pipeline_mode<synchronous>, transform_indices = @transform_2, window_bounds = array<i64: 8, 1>}, {pipeline_mode = #tpu.pipeline_mode<synchronous>, transform_indices = @transform_3, window_bounds = array<i64: 128, 128>}, {pipeline_mode = #tpu.pipeline_mode<synchronous>, transform_indices = @transform_4, window_bounds = array<i64: 128, 128>}, {pipeline_mode = #tpu.pipeline_mode<synchronous>, transform_indices = @transform_5, window_bounds = array<i64: 1, 128>}, {pipeline_mode = #tpu.pipeline_mode<synchronous>, transform_indices = @transform_6, window_bounds = array<i64: 128, 128>}, {pipeline_mode = #tpu.pipeline_mode<synchronous>, transform_indices = @transform_7, window_bounds = array<i64: 1, 128>}, {pipeline_mode = #tpu.pipeline_mode<synchronous>, transform_indices = @transform_8, window_bounds = array<i64: 128, 128>}, {pipeline_mode = #tpu.pipeline_mode<synchronous>, transform_indices = @transform_9, window_bounds = array<i64: 128, 128>}, {pipeline_mode = #tpu.pipeline_mode<synchronous>, transform_indices = @transform_10, window_bounds = array<i64: 1, 128>}, {pipeline_mode = #tpu.pipeline_mode<synchronous>, transform_indices = @transform_11, window_bounds = array<i64: 8, 128>}]} {
    %cst = arith.constant 0.000000e+00 : f32
    %0 = vector.broadcast %cst : f32 to vector<16x128xf32>
    %c0 = arith.constant 0 : index
    %c0_0 = arith.constant 0 : index
    %1 = vector.load %arg18[%c0, %c0_0] : memref<16x128xf32, #tpu.memory_space<vmem>>, vector<16x128xf32>
    tpu.vector_store %arg18[%c0, %c0_0], %0 {strides = array<i32>} : memref<16x128xf32, #tpu.memory_space<vmem>>, vector<16x128xf32>,
    %c0_i32 = arith.constant 0 : i32
    %c12_i32 = arith.constant 12 : i32
    %2 = arith.addi %c0_i32, %c12_i32 : i32
    %c1_i32 = arith.constant 1 : i32
    scf.for %arg20 = %c0_i32 to %2 step %c1_i32  : i32 {
      %c1_i32_137 = arith.constant 1 : i32
      %113 = arith.muli %arg20, %c1_i32_137 : i32
      %c0_i32_138 = arith.constant 0 : i32
      %114 = arith.addi %c0_i32_138, %113 : i32
      %115 = arith.index_cast %114 : i32 to index
      %116 = memref.load %arg1[%115] : memref<12xi32, #tpu.memory_space<smem>>
      %117 = arith.index_cast %116 : i32 to index
      %c0_139 = arith.constant 0 : index
      %118 = vector.load %arg4[%117, %c0_139] : memref<8x128xf32, #tpu.memory_space<vmem>>, vector<1x128xf32>
      %119 = arith.index_cast %114 : i32 to index
      %c0_140 = arith.constant 0 : index
      %120 = vector.load %arg18[%119, %c0_140] : memref<16x128xf32, #tpu.memory_space<vmem>>, vector<1x128xf32>
      tpu.vector_store %arg18[%119, %c0_140], %118 {strides = array<i32>} : memref<16x128xf32, #tpu.memory_space<vmem>>, vector<1x128xf32>,
    }
    %c12_i32_1 = arith.constant 12 : i32
    %c0_2 = arith.constant 0 : index
    %c0_3 = arith.constant 0 : index
    %3 = vector.load %arg18[%c0_2, %c0_3] : memref<16x128xf32, #tpu.memory_space<vmem>>, vector<16x128xf32>
    %4 = arith.truncf %3 : vector<16x128xf32> to vector<16x128xbf16>
    %c0_4 = arith.constant 0 : index
    %c0_5 = arith.constant 0 : index
    %5 = vector.load %arg7[%c0_4, %c0_5] : memref<128x128xbf16, #tpu.memory_space<vmem>>, vector<128x128xbf16>
    %cst_6 = arith.constant dense<0.000000e+00> : vector<16x128xf32>
    %6 = tpu.matmul %4, %5, %cst_6 {dimension_numbers = #tpu.dot_dimension_numbers<[1], [0], [0], [1], [0, 0, 1, 1], [], []>} : vector<16x128xbf16>, vector<128x128xbf16>, vector<16x128xf32> -> vector<16x128xf32>
    %c0_7 = arith.constant 0 : index
    %c0_8 = arith.constant 0 : index
    %7 = vector.load %arg5[%c0_7, %c0_8] : memref<16x128xf32, #tpu.memory_space<vmem>>, vector<16x128xf32>
    %8 = arith.truncf %7 : vector<16x128xf32> to vector<16x128xbf16>
    %c0_9 = arith.constant 0 : index
    %c0_10 = arith.constant 0 : index
    %9 = vector.load %arg8[%c0_9, %c0_10] : memref<128x128xbf16, #tpu.memory_space<vmem>>, vector<128x128xbf16>
    %cst_11 = arith.constant dense<0.000000e+00> : vector<16x128xf32>
    %10 = tpu.matmul %8, %9, %cst_11 {dimension_numbers = #tpu.dot_dimension_numbers<[1], [0], [0], [1], [0, 0, 1, 1], [], []>} : vector<16x128xbf16>, vector<128x128xbf16>, vector<16x128xf32> -> vector<16x128xf32>
    %11 = arith.addf %6, %10 : vector<16x128xf32>
    %c0_12 = arith.constant 0 : index
    %c0_13 = arith.constant 0 : index
    %12 = vector.load %arg9[%c0_12, %c0_13] : memref<1x128xf32, #tpu.memory_space<vmem>>, vector<1x128xf32>
    %13 = vector.broadcast %12 : vector<1x128xf32> to vector<16x128xf32>
    %14 = arith.addf %11, %13 : vector<16x128xf32>
    %c0_14 = arith.constant 0 : index
    %c0_15 = arith.constant 0 : index
    %15 = vector.load %arg17[%c0_14, %c0_15] : memref<16x128xf32, #tpu.memory_space<vmem>>, vector<16x128xf32>
    tpu.vector_store %arg17[%c0_14, %c0_15], %14 {strides = array<i32>} : memref<16x128xf32, #tpu.memory_space<vmem>>, vector<16x128xf32>,
    %cst_16 = arith.constant 0.000000e+00 : f32
    %16 = vector.broadcast %cst_16 : f32 to vector<16x128xf32>
    %17 = arith.maximumf %14, %16 : vector<16x128xf32>
    %c0_17 = arith.constant 0 : index
    %c0_18 = arith.constant 0 : index
    %18 = vector.load %arg16[%c0_17, %c0_18] : memref<16x128xf32, #tpu.memory_space<vmem>>, vector<16x128xf32>
    tpu.vector_store %arg16[%c0_17, %c0_18], %17 {strides = array<i32>} : memref<16x128xf32, #tpu.memory_space<vmem>>, vector<16x128xf32>,
    %cst_19 = arith.constant 0.000000e+00 : f32
    %19 = vector.broadcast %cst_19 : f32 to vector<8x128xf32>
    %c0_20 = arith.constant 0 : index
    %c0_21 = arith.constant 0 : index
    %20 = vector.load %arg19[%c0_20, %c0_21] : memref<8x128xf32, #tpu.memory_space<vmem>>, vector<8x128xf32>
    tpu.vector_store %arg19[%c0_20, %c0_21], %19 {strides = array<i32>} : memref<8x128xf32, #tpu.memory_space<vmem>>, vector<8x128xf32>,
    %c0_i32_22 = arith.constant 0 : i32
    %c12_i32_23 = arith.constant 12 : i32
    %21 = arith.addi %c0_i32_22, %c12_i32_23 : i32
    %c1_i32_24 = arith.constant 1 : i32
    scf.for %arg20 = %c0_i32_22 to %21 step %c1_i32_24  : i32 {
      %c1_i32_137 = arith.constant 1 : i32
      %113 = arith.muli %arg20, %c1_i32_137 : i32
      %c0_i32_138 = arith.constant 0 : i32
      %114 = arith.addi %c0_i32_138, %113 : i32
      %115 = arith.index_cast %114 : i32 to index
      %116 = memref.load %arg2[%115] : memref<12xi32, #tpu.memory_space<smem>>
      %117 = arith.index_cast %116 : i32 to index
      %c0_139 = arith.constant 0 : index
      %118 = vector.load %arg19[%117, %c0_139] : memref<8x128xf32, #tpu.memory_space<vmem>>, vector<1x128xf32>
      %119 = arith.index_cast %114 : i32 to index
      %c0_140 = arith.constant 0 : index
      %120 = vector.load %arg16[%119, %c0_140] : memref<16x128xf32, #tpu.memory_space<vmem>>, vector<1x128xf32>
      %121 = arith.addf %118, %120 : vector<1x128xf32>
      %122 = arith.index_cast %116 : i32 to index
      %c0_141 = arith.constant 0 : index
      %123 = vector.load %arg19[%122, %c0_141] : memref<8x128xf32, #tpu.memory_space<vmem>>, vector<1x128xf32>
      tpu.vector_store %arg19[%122, %c0_141], %121 {strides = array<i32>} : memref<8x128xf32, #tpu.memory_space<vmem>>, vector<1x128xf32>,
    }
    %c12_i32_25 = arith.constant 12 : i32
    %c0_i32_26 = arith.constant 0 : i32
    %c12_i32_27 = arith.constant 12 : i32
    %22 = arith.addi %c0_i32_26, %c12_i32_27 : i32
    %c1_i32_28 = arith.constant 1 : i32
    scf.for %arg20 = %c0_i32_26 to %22 step %c1_i32_28  : i32 {
      %c1_i32_137 = arith.constant 1 : i32
      %113 = arith.muli %arg20, %c1_i32_137 : i32
      %c0_i32_138 = arith.constant 0 : i32
      %114 = arith.addi %c0_i32_138, %113 : i32
      %115 = arith.index_cast %114 : i32 to index
      %116 = memref.load %arg1[%115] : memref<12xi32, #tpu.memory_space<smem>>
      %117 = arith.index_cast %114 : i32 to index
      %118 = memref.load %arg3[%117] : memref<12xi32, #tpu.memory_space<smem>>
      %c0_i32_139 = arith.constant 0 : i32
      %119 = arith.cmpi sge, %118, %c0_i32_139 : i32
      %120 = arith.extui %119 : i1 to i32
      %121 = arith.sitofp %120 : i32 to f32
      %c0_i32_140 = arith.constant 0 : i32
      %122 = arith.maxsi %118, %c0_i32_140 : i32
      %123 = arith.index_cast %116 : i32 to index
      %c0_141 = arith.constant 0 : index
      %124 = vector.load %arg19[%123, %c0_141] : memref<8x128xf32, #tpu.memory_space<vmem>>, vector<1x128xf32>
      %125 = arith.index_cast %122 : i32 to index
      %c0_142 = arith.constant 0 : index
      %126 = vector.load %arg16[%125, %c0_142] : memref<16x128xf32, #tpu.memory_space<vmem>>, vector<1x128xf32>
      %127 = vector.broadcast %121 : f32 to vector<1x128xf32>
      %128 = arith.mulf %127, %126 : vector<1x128xf32>
      %129 = arith.subf %124, %128 : vector<1x128xf32>
      %130 = arith.index_cast %114 : i32 to index
      %c0_143 = arith.constant 0 : index
      %131 = vector.load %arg18[%130, %c0_143] : memref<16x128xf32, #tpu.memory_space<vmem>>, vector<1x128xf32>
      tpu.vector_store %arg18[%130, %c0_143], %129 {strides = array<i32>} : memref<16x128xf32, #tpu.memory_space<vmem>>, vector<1x128xf32>,
    }
    %c12_i32_29 = arith.constant 12 : i32
    %c0_30 = arith.constant 0 : index
    %c0_31 = arith.constant 0 : index
    %23 = vector.load %arg18[%c0_30, %c0_31] : memref<16x128xf32, #tpu.memory_space<vmem>>, vector<16x128xf32>
    %24 = arith.truncf %23 : vector<16x128xf32> to vector<16x128xbf16>
    %c0_32 = arith.constant 0 : index
    %c0_33 = arith.constant 0 : index
    %25 = vector.load %arg10[%c0_32, %c0_33] : memref<128x128xbf16, #tpu.memory_space<vmem>>, vector<128x128xbf16>
    %cst_34 = arith.constant dense<0.000000e+00> : vector<16x128xf32>
    %26 = tpu.matmul %24, %25, %cst_34 {dimension_numbers = #tpu.dot_dimension_numbers<[1], [0], [0], [1], [0, 0, 1, 1], [], []>} : vector<16x128xbf16>, vector<128x128xbf16>, vector<16x128xf32> -> vector<16x128xf32>
    %c0_35 = arith.constant 0 : index
    %c0_36 = arith.constant 0 : index
    %27 = vector.load %arg11[%c0_35, %c0_36] : memref<1x128xf32, #tpu.memory_space<vmem>>, vector<1x128xf32>
    %28 = vector.broadcast %27 : vector<1x128xf32> to vector<16x128xf32>
    %29 = arith.addf %26, %28 : vector<16x128xf32>
    %c0_37 = arith.constant 0 : index
    %c0_38 = arith.constant 0 : index
    %30 = vector.load %arg17[%c0_37, %c0_38] : memref<16x128xf32, #tpu.memory_space<vmem>>, vector<16x128xf32>
    %31 = arith.addf %30, %29 : vector<16x128xf32>
    %cst_39 = arith.constant 0.000000e+00 : f32
    %32 = vector.broadcast %cst_39 : f32 to vector<16x128xf32>
    %33 = arith.maximumf %31, %32 : vector<16x128xf32>
    %c0_40 = arith.constant 0 : index
    %c0_41 = arith.constant 0 : index
    %34 = vector.load %arg16[%c0_40, %c0_41] : memref<16x128xf32, #tpu.memory_space<vmem>>, vector<16x128xf32>
    tpu.vector_store %arg16[%c0_40, %c0_41], %33 {strides = array<i32>} : memref<16x128xf32, #tpu.memory_space<vmem>>, vector<16x128xf32>,
    %cst_42 = arith.constant 0.000000e+00 : f32
    %35 = vector.broadcast %cst_42 : f32 to vector<8x128xf32>
    %c0_43 = arith.constant 0 : index
    %c0_44 = arith.constant 0 : index
    %36 = vector.load %arg19[%c0_43, %c0_44] : memref<8x128xf32, #tpu.memory_space<vmem>>, vector<8x128xf32>
    tpu.vector_store %arg19[%c0_43, %c0_44], %35 {strides = array<i32>} : memref<8x128xf32, #tpu.memory_space<vmem>>, vector<8x128xf32>,
    %c0_i32_45 = arith.constant 0 : i32
    %c12_i32_46 = arith.constant 12 : i32
    %37 = arith.addi %c0_i32_45, %c12_i32_46 : i32
    %c1_i32_47 = arith.constant 1 : i32
    scf.for %arg20 = %c0_i32_45 to %37 step %c1_i32_47  : i32 {
      %c1_i32_137 = arith.constant 1 : i32
      %113 = arith.muli %arg20, %c1_i32_137 : i32
      %c0_i32_138 = arith.constant 0 : i32
      %114 = arith.addi %c0_i32_138, %113 : i32
      %115 = arith.index_cast %114 : i32 to index
      %116 = memref.load %arg2[%115] : memref<12xi32, #tpu.memory_space<smem>>
      %117 = arith.index_cast %116 : i32 to index
      %c0_139 = arith.constant 0 : index
      %118 = vector.load %arg19[%117, %c0_139] : memref<8x128xf32, #tpu.memory_space<vmem>>, vector<1x128xf32>
      %119 = arith.index_cast %114 : i32 to index
      %c0_140 = arith.constant 0 : index
      %120 = vector.load %arg16[%119, %c0_140] : memref<16x128xf32, #tpu.memory_space<vmem>>, vector<1x128xf32>
      %121 = arith.addf %118, %120 : vector<1x128xf32>
      %122 = arith.index_cast %116 : i32 to index
      %c0_141 = arith.constant 0 : index
      %123 = vector.load %arg19[%122, %c0_141] : memref<8x128xf32, #tpu.memory_space<vmem>>, vector<1x128xf32>
      tpu.vector_store %arg19[%122, %c0_141], %121 {strides = array<i32>} : memref<8x128xf32, #tpu.memory_space<vmem>>, vector<1x128xf32>,
    }
    %c12_i32_48 = arith.constant 12 : i32
    %c0_i32_49 = arith.constant 0 : i32
    %c12_i32_50 = arith.constant 12 : i32
    %38 = arith.addi %c0_i32_49, %c12_i32_50 : i32
    %c1_i32_51 = arith.constant 1 : i32
    scf.for %arg20 = %c0_i32_49 to %38 step %c1_i32_51  : i32 {
      %c1_i32_137 = arith.constant 1 : i32
      %113 = arith.muli %arg20, %c1_i32_137 : i32
      %c0_i32_138 = arith.constant 0 : i32
      %114 = arith.addi %c0_i32_138, %113 : i32
      %115 = arith.index_cast %114 : i32 to index
      %116 = memref.load %arg1[%115] : memref<12xi32, #tpu.memory_space<smem>>
      %117 = arith.index_cast %114 : i32 to index
      %118 = memref.load %arg3[%117] : memref<12xi32, #tpu.memory_space<smem>>
      %c0_i32_139 = arith.constant 0 : i32
      %119 = arith.cmpi sge, %118, %c0_i32_139 : i32
      %120 = arith.extui %119 : i1 to i32
      %121 = arith.sitofp %120 : i32 to f32
      %c0_i32_140 = arith.constant 0 : i32
      %122 = arith.maxsi %118, %c0_i32_140 : i32
      %123 = arith.index_cast %116 : i32 to index
      %c0_141 = arith.constant 0 : index
      %124 = vector.load %arg19[%123, %c0_141] : memref<8x128xf32, #tpu.memory_space<vmem>>, vector<1x128xf32>
      %125 = arith.index_cast %122 : i32 to index
      %c0_142 = arith.constant 0 : index
      %126 = vector.load %arg16[%125, %c0_142] : memref<16x128xf32, #tpu.memory_space<vmem>>, vector<1x128xf32>
      %127 = vector.broadcast %121 : f32 to vector<1x128xf32>
      %128 = arith.mulf %127, %126 : vector<1x128xf32>
      %129 = arith.subf %124, %128 : vector<1x128xf32>
      %130 = arith.index_cast %114 : i32 to index
      %c0_143 = arith.constant 0 : index
      %131 = vector.load %arg18[%130, %c0_143] : memref<16x128xf32, #tpu.memory_space<vmem>>, vector<1x128xf32>
      tpu.vector_store %arg18[%130, %c0_143], %129 {strides = array<i32>} : memref<16x128xf32, #tpu.memory_space<vmem>>, vector<1x128xf32>,
    }
    %c12_i32_52 = arith.constant 12 : i32
    %c0_53 = arith.constant 0 : index
    %c0_54 = arith.constant 0 : index
    %39 = vector.load %arg18[%c0_53, %c0_54] : memref<16x128xf32, #tpu.memory_space<vmem>>, vector<16x128xf32>
    %40 = arith.truncf %39 : vector<16x128xf32> to vector<16x128xbf16>
    %c0_55 = arith.constant 0 : index
    %c0_56 = arith.constant 0 : index
    %41 = vector.load %arg10[%c0_55, %c0_56] : memref<128x128xbf16, #tpu.memory_space<vmem>>, vector<128x128xbf16>
    %cst_57 = arith.constant dense<0.000000e+00> : vector<16x128xf32>
    %42 = tpu.matmul %40, %41, %cst_57 {dimension_numbers = #tpu.dot_dimension_numbers<[1], [0], [0], [1], [0, 0, 1, 1], [], []>} : vector<16x128xbf16>, vector<128x128xbf16>, vector<16x128xf32> -> vector<16x128xf32>
    %c0_58 = arith.constant 0 : index
    %c0_59 = arith.constant 0 : index
    %43 = vector.load %arg11[%c0_58, %c0_59] : memref<1x128xf32, #tpu.memory_space<vmem>>, vector<1x128xf32>
    %44 = vector.broadcast %43 : vector<1x128xf32> to vector<16x128xf32>
    %45 = arith.addf %42, %44 : vector<16x128xf32>
    %c0_60 = arith.constant 0 : index
    %c0_61 = arith.constant 0 : index
    %46 = vector.load %arg17[%c0_60, %c0_61] : memref<16x128xf32, #tpu.memory_space<vmem>>, vector<16x128xf32>
    %47 = arith.addf %46, %45 : vector<16x128xf32>
    %cst_62 = arith.constant 0.000000e+00 : f32
    %48 = vector.broadcast %cst_62 : f32 to vector<16x128xf32>
    %49 = arith.maximumf %47, %48 : vector<16x128xf32>
    %c0_63 = arith.constant 0 : index
    %c0_64 = arith.constant 0 : index
    %50 = vector.load %arg16[%c0_63, %c0_64] : memref<16x128xf32, #tpu.memory_space<vmem>>, vector<16x128xf32>
    tpu.vector_store %arg16[%c0_63, %c0_64], %49 {strides = array<i32>} : memref<16x128xf32, #tpu.memory_space<vmem>>, vector<16x128xf32>,
    %cst_65 = arith.constant 0.000000e+00 : f32
    %51 = vector.broadcast %cst_65 : f32 to vector<8x128xf32>
    %c0_66 = arith.constant 0 : index
    %c0_67 = arith.constant 0 : index
    %52 = vector.load %arg19[%c0_66, %c0_67] : memref<8x128xf32, #tpu.memory_space<vmem>>, vector<8x128xf32>
    tpu.vector_store %arg19[%c0_66, %c0_67], %51 {strides = array<i32>} : memref<8x128xf32, #tpu.memory_space<vmem>>, vector<8x128xf32>,
    %c0_i32_68 = arith.constant 0 : i32
    %c12_i32_69 = arith.constant 12 : i32
    %53 = arith.addi %c0_i32_68, %c12_i32_69 : i32
    %c1_i32_70 = arith.constant 1 : i32
    scf.for %arg20 = %c0_i32_68 to %53 step %c1_i32_70  : i32 {
      %c1_i32_137 = arith.constant 1 : i32
      %113 = arith.muli %arg20, %c1_i32_137 : i32
      %c0_i32_138 = arith.constant 0 : i32
      %114 = arith.addi %c0_i32_138, %113 : i32
      %115 = arith.index_cast %114 : i32 to index
      %116 = memref.load %arg2[%115] : memref<12xi32, #tpu.memory_space<smem>>
      %117 = arith.index_cast %116 : i32 to index
      %c0_139 = arith.constant 0 : index
      %118 = vector.load %arg19[%117, %c0_139] : memref<8x128xf32, #tpu.memory_space<vmem>>, vector<1x128xf32>
      %119 = arith.index_cast %114 : i32 to index
      %c0_140 = arith.constant 0 : index
      %120 = vector.load %arg16[%119, %c0_140] : memref<16x128xf32, #tpu.memory_space<vmem>>, vector<1x128xf32>
      %121 = arith.addf %118, %120 : vector<1x128xf32>
      %122 = arith.index_cast %116 : i32 to index
      %c0_141 = arith.constant 0 : index
      %123 = vector.load %arg19[%122, %c0_141] : memref<8x128xf32, #tpu.memory_space<vmem>>, vector<1x128xf32>
      tpu.vector_store %arg19[%122, %c0_141], %121 {strides = array<i32>} : memref<8x128xf32, #tpu.memory_space<vmem>>, vector<1x128xf32>,
    }
    %c12_i32_71 = arith.constant 12 : i32
    %c0_i32_72 = arith.constant 0 : i32
    %c12_i32_73 = arith.constant 12 : i32
    %54 = arith.addi %c0_i32_72, %c12_i32_73 : i32
    %c1_i32_74 = arith.constant 1 : i32
    scf.for %arg20 = %c0_i32_72 to %54 step %c1_i32_74  : i32 {
      %c1_i32_137 = arith.constant 1 : i32
      %113 = arith.muli %arg20, %c1_i32_137 : i32
      %c0_i32_138 = arith.constant 0 : i32
      %114 = arith.addi %c0_i32_138, %113 : i32
      %115 = arith.index_cast %114 : i32 to index
      %116 = memref.load %arg1[%115] : memref<12xi32, #tpu.memory_space<smem>>
      %117 = arith.index_cast %114 : i32 to index
      %118 = memref.load %arg3[%117] : memref<12xi32, #tpu.memory_space<smem>>
      %c0_i32_139 = arith.constant 0 : i32
      %119 = arith.cmpi sge, %118, %c0_i32_139 : i32
      %120 = arith.extui %119 : i1 to i32
      %121 = arith.sitofp %120 : i32 to f32
      %c0_i32_140 = arith.constant 0 : i32
      %122 = arith.maxsi %118, %c0_i32_140 : i32
      %123 = arith.index_cast %116 : i32 to index
      %c0_141 = arith.constant 0 : index
      %124 = vector.load %arg19[%123, %c0_141] : memref<8x128xf32, #tpu.memory_space<vmem>>, vector<1x128xf32>
      %125 = arith.index_cast %122 : i32 to index
      %c0_142 = arith.constant 0 : index
      %126 = vector.load %arg16[%125, %c0_142] : memref<16x128xf32, #tpu.memory_space<vmem>>, vector<1x128xf32>
      %127 = vector.broadcast %121 : f32 to vector<1x128xf32>
      %128 = arith.mulf %127, %126 : vector<1x128xf32>
      %129 = arith.subf %124, %128 : vector<1x128xf32>
      %130 = arith.index_cast %114 : i32 to index
      %c0_143 = arith.constant 0 : index
      %131 = vector.load %arg18[%130, %c0_143] : memref<16x128xf32, #tpu.memory_space<vmem>>, vector<1x128xf32>
      tpu.vector_store %arg18[%130, %c0_143], %129 {strides = array<i32>} : memref<16x128xf32, #tpu.memory_space<vmem>>, vector<1x128xf32>,
    }
    %c12_i32_75 = arith.constant 12 : i32
    %c0_76 = arith.constant 0 : index
    %c0_77 = arith.constant 0 : index
    %55 = vector.load %arg18[%c0_76, %c0_77] : memref<16x128xf32, #tpu.memory_space<vmem>>, vector<16x128xf32>
    %56 = arith.truncf %55 : vector<16x128xf32> to vector<16x128xbf16>
    %c0_78 = arith.constant 0 : index
    %c0_79 = arith.constant 0 : index
    %57 = vector.load %arg10[%c0_78, %c0_79] : memref<128x128xbf16, #tpu.memory_space<vmem>>, vector<128x128xbf16>
    %cst_80 = arith.constant dense<0.000000e+00> : vector<16x128xf32>
    %58 = tpu.matmul %56, %57, %cst_80 {dimension_numbers = #tpu.dot_dimension_numbers<[1], [0], [0], [1], [0, 0, 1, 1], [], []>} : vector<16x128xbf16>, vector<128x128xbf16>, vector<16x128xf32> -> vector<16x128xf32>
    %c0_81 = arith.constant 0 : index
    %c0_82 = arith.constant 0 : index
    %59 = vector.load %arg11[%c0_81, %c0_82] : memref<1x128xf32, #tpu.memory_space<vmem>>, vector<1x128xf32>
    %60 = vector.broadcast %59 : vector<1x128xf32> to vector<16x128xf32>
    %61 = arith.addf %58, %60 : vector<16x128xf32>
    %c0_83 = arith.constant 0 : index
    %c0_84 = arith.constant 0 : index
    %62 = vector.load %arg17[%c0_83, %c0_84] : memref<16x128xf32, #tpu.memory_space<vmem>>, vector<16x128xf32>
    %63 = arith.addf %62, %61 : vector<16x128xf32>
    %cst_85 = arith.constant 0.000000e+00 : f32
    %64 = vector.broadcast %cst_85 : f32 to vector<16x128xf32>
    %65 = arith.maximumf %63, %64 : vector<16x128xf32>
    %c0_86 = arith.constant 0 : index
    %c0_87 = arith.constant 0 : index
    %66 = vector.load %arg16[%c0_86, %c0_87] : memref<16x128xf32, #tpu.memory_space<vmem>>, vector<16x128xf32>
    tpu.vector_store %arg16[%c0_86, %c0_87], %65 {strides = array<i32>} : memref<16x128xf32, #tpu.memory_space<vmem>>, vector<16x128xf32>,
    %cst_88 = arith.constant 0.000000e+00 : f32
    %67 = vector.broadcast %cst_88 : f32 to vector<8x128xf32>
    %c0_89 = arith.constant 0 : index
    %c0_90 = arith.constant 0 : index
    %68 = vector.load %arg19[%c0_89, %c0_90] : memref<8x128xf32, #tpu.memory_space<vmem>>, vector<8x128xf32>
    tpu.vector_store %arg19[%c0_89, %c0_90], %67 {strides = array<i32>} : memref<8x128xf32, #tpu.memory_space<vmem>>, vector<8x128xf32>,
    %c0_i32_91 = arith.constant 0 : i32
    %c12_i32_92 = arith.constant 12 : i32
    %69 = arith.addi %c0_i32_91, %c12_i32_92 : i32
    %c1_i32_93 = arith.constant 1 : i32
    scf.for %arg20 = %c0_i32_91 to %69 step %c1_i32_93  : i32 {
      %c1_i32_137 = arith.constant 1 : i32
      %113 = arith.muli %arg20, %c1_i32_137 : i32
      %c0_i32_138 = arith.constant 0 : i32
      %114 = arith.addi %c0_i32_138, %113 : i32
      %115 = arith.index_cast %114 : i32 to index
      %116 = memref.load %arg2[%115] : memref<12xi32, #tpu.memory_space<smem>>
      %117 = arith.index_cast %116 : i32 to index
      %c0_139 = arith.constant 0 : index
      %118 = vector.load %arg19[%117, %c0_139] : memref<8x128xf32, #tpu.memory_space<vmem>>, vector<1x128xf32>
      %119 = arith.index_cast %114 : i32 to index
      %c0_140 = arith.constant 0 : index
      %120 = vector.load %arg16[%119, %c0_140] : memref<16x128xf32, #tpu.memory_space<vmem>>, vector<1x128xf32>
      %121 = arith.addf %118, %120 : vector<1x128xf32>
      %122 = arith.index_cast %116 : i32 to index
      %c0_141 = arith.constant 0 : index
      %123 = vector.load %arg19[%122, %c0_141] : memref<8x128xf32, #tpu.memory_space<vmem>>, vector<1x128xf32>
      tpu.vector_store %arg19[%122, %c0_141], %121 {strides = array<i32>} : memref<8x128xf32, #tpu.memory_space<vmem>>, vector<1x128xf32>,
    }
    %c12_i32_94 = arith.constant 12 : i32
    %c0_i32_95 = arith.constant 0 : i32
    %c12_i32_96 = arith.constant 12 : i32
    %70 = arith.addi %c0_i32_95, %c12_i32_96 : i32
    %c1_i32_97 = arith.constant 1 : i32
    scf.for %arg20 = %c0_i32_95 to %70 step %c1_i32_97  : i32 {
      %c1_i32_137 = arith.constant 1 : i32
      %113 = arith.muli %arg20, %c1_i32_137 : i32
      %c0_i32_138 = arith.constant 0 : i32
      %114 = arith.addi %c0_i32_138, %113 : i32
      %115 = arith.index_cast %114 : i32 to index
      %116 = memref.load %arg1[%115] : memref<12xi32, #tpu.memory_space<smem>>
      %117 = arith.index_cast %114 : i32 to index
      %118 = memref.load %arg3[%117] : memref<12xi32, #tpu.memory_space<smem>>
      %c0_i32_139 = arith.constant 0 : i32
      %119 = arith.cmpi sge, %118, %c0_i32_139 : i32
      %120 = arith.extui %119 : i1 to i32
      %121 = arith.sitofp %120 : i32 to f32
      %c0_i32_140 = arith.constant 0 : i32
      %122 = arith.maxsi %118, %c0_i32_140 : i32
      %123 = arith.index_cast %116 : i32 to index
      %c0_141 = arith.constant 0 : index
      %124 = vector.load %arg19[%123, %c0_141] : memref<8x128xf32, #tpu.memory_space<vmem>>, vector<1x128xf32>
      %125 = arith.index_cast %122 : i32 to index
      %c0_142 = arith.constant 0 : index
      %126 = vector.load %arg16[%125, %c0_142] : memref<16x128xf32, #tpu.memory_space<vmem>>, vector<1x128xf32>
      %127 = vector.broadcast %121 : f32 to vector<1x128xf32>
      %128 = arith.mulf %127, %126 : vector<1x128xf32>
      %129 = arith.subf %124, %128 : vector<1x128xf32>
      %130 = arith.index_cast %114 : i32 to index
      %c0_143 = arith.constant 0 : index
      %131 = vector.load %arg18[%130, %c0_143] : memref<16x128xf32, #tpu.memory_space<vmem>>, vector<1x128xf32>
      tpu.vector_store %arg18[%130, %c0_143], %129 {strides = array<i32>} : memref<16x128xf32, #tpu.memory_space<vmem>>, vector<1x128xf32>,
    }
    %c12_i32_98 = arith.constant 12 : i32
    %c0_99 = arith.constant 0 : index
    %c0_100 = arith.constant 0 : index
    %71 = vector.load %arg18[%c0_99, %c0_100] : memref<16x128xf32, #tpu.memory_space<vmem>>, vector<16x128xf32>
    %72 = arith.truncf %71 : vector<16x128xf32> to vector<16x128xbf16>
    %c0_101 = arith.constant 0 : index
    %c0_102 = arith.constant 0 : index
    %73 = vector.load %arg10[%c0_101, %c0_102] : memref<128x128xbf16, #tpu.memory_space<vmem>>, vector<128x128xbf16>
    %cst_103 = arith.constant dense<0.000000e+00> : vector<16x128xf32>
    %74 = tpu.matmul %72, %73, %cst_103 {dimension_numbers = #tpu.dot_dimension_numbers<[1], [0], [0], [1], [0, 0, 1, 1], [], []>} : vector<16x128xbf16>, vector<128x128xbf16>, vector<16x128xf32> -> vector<16x128xf32>
    %c0_104 = arith.constant 0 : index
    %c0_105 = arith.constant 0 : index
    %75 = vector.load %arg11[%c0_104, %c0_105] : memref<1x128xf32, #tpu.memory_space<vmem>>, vector<1x128xf32>
    %76 = vector.broadcast %75 : vector<1x128xf32> to vector<16x128xf32>
    %77 = arith.addf %74, %76 : vector<16x128xf32>
    %c0_106 = arith.constant 0 : index
    %c0_107 = arith.constant 0 : index
    %78 = vector.load %arg17[%c0_106, %c0_107] : memref<16x128xf32, #tpu.memory_space<vmem>>, vector<16x128xf32>
    %79 = arith.addf %78, %77 : vector<16x128xf32>
    %cst_108 = arith.constant 0.000000e+00 : f32
    %80 = vector.broadcast %cst_108 : f32 to vector<16x128xf32>
    %81 = arith.maximumf %79, %80 : vector<16x128xf32>
    %c0_109 = arith.constant 0 : index
    %c0_110 = arith.constant 0 : index
    %82 = vector.load %arg16[%c0_109, %c0_110] : memref<16x128xf32, #tpu.memory_space<vmem>>, vector<16x128xf32>
    tpu.vector_store %arg16[%c0_109, %c0_110], %81 {strides = array<i32>} : memref<16x128xf32, #tpu.memory_space<vmem>>, vector<16x128xf32>,
    %cst_111 = arith.constant 0.000000e+00 : f32
    %83 = vector.broadcast %cst_111 : f32 to vector<8x128xf32>
    %c0_112 = arith.constant 0 : index
    %c0_113 = arith.constant 0 : index
    %84 = vector.load %arg19[%c0_112, %c0_113] : memref<8x128xf32, #tpu.memory_space<vmem>>, vector<8x128xf32>
    tpu.vector_store %arg19[%c0_112, %c0_113], %83 {strides = array<i32>} : memref<8x128xf32, #tpu.memory_space<vmem>>, vector<8x128xf32>,
    %c0_i32_114 = arith.constant 0 : i32
    %c12_i32_115 = arith.constant 12 : i32
    %85 = arith.addi %c0_i32_114, %c12_i32_115 : i32
    %c1_i32_116 = arith.constant 1 : i32
    scf.for %arg20 = %c0_i32_114 to %85 step %c1_i32_116  : i32 {
      %c1_i32_137 = arith.constant 1 : i32
      %113 = arith.muli %arg20, %c1_i32_137 : i32
      %c0_i32_138 = arith.constant 0 : i32
      %114 = arith.addi %c0_i32_138, %113 : i32
      %115 = arith.index_cast %114 : i32 to index
      %116 = memref.load %arg2[%115] : memref<12xi32, #tpu.memory_space<smem>>
      %117 = arith.index_cast %116 : i32 to index
      %c0_139 = arith.constant 0 : index
      %118 = vector.load %arg19[%117, %c0_139] : memref<8x128xf32, #tpu.memory_space<vmem>>, vector<1x128xf32>
      %119 = arith.index_cast %114 : i32 to index
      %c0_140 = arith.constant 0 : index
      %120 = vector.load %arg16[%119, %c0_140] : memref<16x128xf32, #tpu.memory_space<vmem>>, vector<1x128xf32>
      %121 = arith.addf %118, %120 : vector<1x128xf32>
      %122 = arith.index_cast %116 : i32 to index
      %c0_141 = arith.constant 0 : index
      %123 = vector.load %arg19[%122, %c0_141] : memref<8x128xf32, #tpu.memory_space<vmem>>, vector<1x128xf32>
      tpu.vector_store %arg19[%122, %c0_141], %121 {strides = array<i32>} : memref<8x128xf32, #tpu.memory_space<vmem>>, vector<1x128xf32>,
    }
    %c12_i32_117 = arith.constant 12 : i32
    %c0_118 = arith.constant 0 : index
    %c0_119 = arith.constant 0 : index
    %86 = vector.load %arg4[%c0_118, %c0_119] : memref<8x128xf32, #tpu.memory_space<vmem>>, vector<8x128xf32>
    %c0_120 = arith.constant 0 : index
    %c0_121 = arith.constant 0 : index
    %87 = vector.load %arg6[%c0_120, %c0_121] : memref<8x1xf32, #tpu.memory_space<vmem>>, vector<8x1xf32>
    %cst_122 = arith.constant 0.000000e+00 : f32
    %88 = vector.broadcast %cst_122 : f32 to vector<8x1xf32>
    %89 = arith.cmpf ogt, %87, %88 : vector<8x1xf32>
    %90 = arith.extui %89 : vector<8x1xi1> to vector<8x1xi32>
    %91 = arith.sitofp %90 : vector<8x1xi32> to vector<8x1xf32>
    %c0_123 = arith.constant 0 : index
    %c0_124 = arith.constant 0 : index
    %92 = vector.load %arg19[%c0_123, %c0_124] : memref<8x128xf32, #tpu.memory_space<vmem>>, vector<8x128xf32>
    %93 = vector.broadcast %91 : vector<8x1xf32> to vector<8x128xf32>
    %94 = arith.mulf %92, %93 : vector<8x128xf32>
    %cst_125 = arith.constant 1.000000e+00 : f32
    %95 = vector.broadcast %cst_125 : f32 to vector<8x1xf32>
    %96 = arith.subf %95, %91 : vector<8x1xf32>
    %97 = vector.broadcast %96 : vector<8x1xf32> to vector<8x128xf32>
    %98 = arith.mulf %86, %97 : vector<8x128xf32>
    %99 = arith.addf %94, %98 : vector<8x128xf32>
    %100 = arith.truncf %86 : vector<8x128xf32> to vector<8x128xbf16>
    %c0_126 = arith.constant 0 : index
    %c0_127 = arith.constant 0 : index
    %101 = vector.load %arg12[%c0_126, %c0_127] : memref<128x128xbf16, #tpu.memory_space<vmem>>, vector<128x128xbf16>
    %cst_128 = arith.constant dense<0.000000e+00> : vector<8x128xf32>
    %102 = tpu.matmul %100, %101, %cst_128 {dimension_numbers = #tpu.dot_dimension_numbers<[1], [0], [0], [1], [0, 0, 1, 1], [], []>} : vector<8x128xbf16>, vector<128x128xbf16>, vector<8x128xf32> -> vector<8x128xf32>
    %103 = arith.truncf %99 : vector<8x128xf32> to vector<8x128xbf16>
    %c0_129 = arith.constant 0 : index
    %c0_130 = arith.constant 0 : index
    %104 = vector.load %arg13[%c0_129, %c0_130] : memref<128x128xbf16, #tpu.memory_space<vmem>>, vector<128x128xbf16>
    %cst_131 = arith.constant dense<0.000000e+00> : vector<8x128xf32>
    %105 = tpu.matmul %103, %104, %cst_131 {dimension_numbers = #tpu.dot_dimension_numbers<[1], [0], [0], [1], [0, 0, 1, 1], [], []>} : vector<8x128xbf16>, vector<128x128xbf16>, vector<8x128xf32> -> vector<8x128xf32>
    %106 = arith.addf %102, %105 : vector<8x128xf32>
    %c0_132 = arith.constant 0 : index
    %c0_133 = arith.constant 0 : index
    %107 = vector.load %arg14[%c0_132, %c0_133] : memref<1x128xf32, #tpu.memory_space<vmem>>, vector<1x128xf32>
    %108 = vector.broadcast %107 : vector<1x128xf32> to vector<8x128xf32>
    %109 = arith.addf %106, %108 : vector<8x128xf32>
    %cst_134 = arith.constant 0.000000e+00 : f32
    %110 = vector.broadcast %cst_134 : f32 to vector<8x128xf32>
    %111 = arith.maximumf %109, %110 : vector<8x128xf32>
    %c0_135 = arith.constant 0 : index
    %c0_136 = arith.constant 0 : index
    %112 = vector.load %arg15[%c0_135, %c0_136] : memref<8x128xf32, #tpu.memory_space<vmem>>, vector<8x128xf32>
    tpu.vector_store %arg15[%c0_135, %c0_136], %111 {strides = array<i32>} : memref<8x128xf32, #tpu.memory_space<vmem>>, vector<8x128xf32>,
    return
  }
  func.func @transform_0(%arg0: i32, %arg1: memref<12xi32, #tpu.memory_space<smem>>, %arg2: memref<12xi32, #tpu.memory_space<smem>>, %arg3: memref<12xi32, #tpu.memory_space<smem>>) -> (i32, i32) {
    %c0_i32 = arith.constant 0 : i32
    %c0_i32_0 = arith.constant 0 : i32
    %c0_i32_1 = arith.constant 0 : i32
    return %c0_i32, %c0_i32_0 : i32, i32
  }
  func.func @transform_1(%arg0: i32, %arg1: memref<12xi32, #tpu.memory_space<smem>>, %arg2: memref<12xi32, #tpu.memory_space<smem>>, %arg3: memref<12xi32, #tpu.memory_space<smem>>) -> (i32, i32) {
    %c0_i32 = arith.constant 0 : i32
    %c0_i32_0 = arith.constant 0 : i32
    %c0_i32_1 = arith.constant 0 : i32
    return %c0_i32, %c0_i32_0 : i32, i32
  }
  func.func @transform_2(%arg0: i32, %arg1: memref<12xi32, #tpu.memory_space<smem>>, %arg2: memref<12xi32, #tpu.memory_space<smem>>, %arg3: memref<12xi32, #tpu.memory_space<smem>>) -> (i32, i32) {
    %c0_i32 = arith.constant 0 : i32
    %c0_i32_0 = arith.constant 0 : i32
    %c0_i32_1 = arith.constant 0 : i32
    return %c0_i32, %c0_i32_0 : i32, i32
  }
  func.func @transform_3(%arg0: i32, %arg1: memref<12xi32, #tpu.memory_space<smem>>, %arg2: memref<12xi32, #tpu.memory_space<smem>>, %arg3: memref<12xi32, #tpu.memory_space<smem>>) -> (i32, i32) {
    %c0_i32 = arith.constant 0 : i32
    %c0_i32_0 = arith.constant 0 : i32
    %c0_i32_1 = arith.constant 0 : i32
    return %c0_i32, %c0_i32_0 : i32, i32
  }
  func.func @transform_4(%arg0: i32, %arg1: memref<12xi32, #tpu.memory_space<smem>>, %arg2: memref<12xi32, #tpu.memory_space<smem>>, %arg3: memref<12xi32, #tpu.memory_space<smem>>) -> (i32, i32) {
    %c0_i32 = arith.constant 0 : i32
    %c0_i32_0 = arith.constant 0 : i32
    %c0_i32_1 = arith.constant 0 : i32
    return %c0_i32, %c0_i32_0 : i32, i32
  }
  func.func @transform_5(%arg0: i32, %arg1: memref<12xi32, #tpu.memory_space<smem>>, %arg2: memref<12xi32, #tpu.memory_space<smem>>, %arg3: memref<12xi32, #tpu.memory_space<smem>>) -> (i32, i32) {
    %c0_i32 = arith.constant 0 : i32
    %c0_i32_0 = arith.constant 0 : i32
    %c0_i32_1 = arith.constant 0 : i32
    return %c0_i32, %c0_i32_0 : i32, i32
  }
  func.func @transform_6(%arg0: i32, %arg1: memref<12xi32, #tpu.memory_space<smem>>, %arg2: memref<12xi32, #tpu.memory_space<smem>>, %arg3: memref<12xi32, #tpu.memory_space<smem>>) -> (i32, i32) {
    %c0_i32 = arith.constant 0 : i32
    %c0_i32_0 = arith.constant 0 : i32
    %c0_i32_1 = arith.constant 0 : i32
    return %c0_i32, %c0_i32_0 : i32, i32
  }
  func.func @transform_7(%arg0: i32, %arg1: memref<12xi32, #tpu.memory_space<smem>>, %arg2: memref<12xi32, #tpu.memory_space<smem>>, %arg3: memref<12xi32, #tpu.memory_space<smem>>) -> (i32, i32) {
    %c0_i32 = arith.constant 0 : i32
    %c0_i32_0 = arith.constant 0 : i32
    %c0_i32_1 = arith.constant 0 : i32
    return %c0_i32, %c0_i32_0 : i32, i32
  }
  func.func @transform_8(%arg0: i32, %arg1: memref<12xi32, #tpu.memory_space<smem>>, %arg2: memref<12xi32, #tpu.memory_space<smem>>, %arg3: memref<12xi32, #tpu.memory_space<smem>>) -> (i32, i32) {
    %c0_i32 = arith.constant 0 : i32
    %c0_i32_0 = arith.constant 0 : i32
    %c0_i32_1 = arith.constant 0 : i32
    return %c0_i32, %c0_i32_0 : i32, i32
  }
  func.func @transform_9(%arg0: i32, %arg1: memref<12xi32, #tpu.memory_space<smem>>, %arg2: memref<12xi32, #tpu.memory_space<smem>>, %arg3: memref<12xi32, #tpu.memory_space<smem>>) -> (i32, i32) {
    %c0_i32 = arith.constant 0 : i32
    %c0_i32_0 = arith.constant 0 : i32
    %c0_i32_1 = arith.constant 0 : i32
    return %c0_i32, %c0_i32_0 : i32, i32
  }
  func.func @transform_10(%arg0: i32, %arg1: memref<12xi32, #tpu.memory_space<smem>>, %arg2: memref<12xi32, #tpu.memory_space<smem>>, %arg3: memref<12xi32, #tpu.memory_space<smem>>) -> (i32, i32) {
    %c0_i32 = arith.constant 0 : i32
    %c0_i32_0 = arith.constant 0 : i32
    %c0_i32_1 = arith.constant 0 : i32
    return %c0_i32, %c0_i32_0 : i32, i32
  }
  func.func @transform_11(%arg0: i32, %arg1: memref<12xi32, #tpu.memory_space<smem>>, %arg2: memref<12xi32, #tpu.memory_space<smem>>, %arg3: memref<12xi32, #tpu.memory_space<smem>>) -> (i32, i32) {
    %c0_i32 = arith.constant 0 : i32
    %c0_i32_0 = arith.constant 0 : i32
    %c0_i32_1 = arith.constant 0 : i32
    return %c0_i32, %c0_i32_0 : i32, i32
  }
}

</mosaic_0001>

<llo_original>
// kernel: tpu_custom_call.1
$region0: #{tpu_custom_call.1}
  #allocation0 [shape = 'u32[]', space=smem, size = 0x4, offset = 0x4, fixed_abs, tag = 'smem constant byte address 0x4 - core index']
  #allocation1 [shape = 'u32[144,128]{1,0:T(1,128)}', space=vmem, size = 0x12000, scoped, tag = 'internal scratch']
  #allocation2 [shape = 'f32[16,128]{1,0:T(8,128)}', space=vmem, size = 0x2000, scoped, tag = 'scratch operand']
  #allocation3 [shape = 'f32[16,128]{1,0:T(8,128)}', space=vmem, size = 0x2000, scoped, tag = 'scratch operand']
  #allocation4 [shape = 'f32[16,128]{1,0:T(8,128)}', space=vmem, size = 0x2000, scoped, tag = 'scratch operand']
  #allocation5 [shape = 'f32[8,128]{1,0:T(8,128)}', space=vmem, size = 0x1000, scoped, tag = 'scratch operand']
  #allocation6 [shape = 's32[1]{0}', space=sflag, size = 0x4, scoped, tag = 'scoped memory for tpu_custom_call.1']
  #allocation7 [shape = 'u8[512]{0}', space=smem, size = 0x200, scoped, tag = 'prefetched SMEM operand 0']
  #allocation8 [shape = 'u8[512]{0}', space=smem, size = 0x200, scoped, tag = 'prefetched SMEM operand 1']
  #allocation9 [shape = 'u8[512]{0}', space=smem, size = 0x200, scoped, tag = 'prefetched SMEM operand 2']
  %s0 = inlined_call_operand.hbm [shape: s32[12], index: 0, kind: input, shape index: {}]
  %s1 = inlined_call_operand.hbm [shape: s32[12], index: 1, kind: input, shape index: {}]
  %s2 = inlined_call_operand.hbm [shape: s32[12], index: 2, kind: input, shape index: {}]
  %s3 = inlined_call_operand.vmem [shape: f32[8,128], index: 3, kind: input, shape index: {}]
  %s4 = inlined_call_operand.vmem [shape: f32[16,128], index: 4, kind: input, shape index: {}]
  %s5 = inlined_call_operand.vmem [shape: f32[8,1], index: 5, kind: input, shape index: {}]
  %s6 = inlined_call_operand.hbm [shape: bf16[128,128], index: 6, kind: input, shape index: {}]
  %s7 = inlined_call_operand.hbm [shape: bf16[128,128], index: 7, kind: input, shape index: {}]
  %s8 = inlined_call_operand.vmem [shape: f32[1,128], index: 8, kind: input, shape index: {}]
  %s9 = inlined_call_operand.hbm [shape: bf16[128,128], index: 9, kind: input, shape index: {}]
  %s10 = inlined_call_operand.vmem [shape: f32[1,128], index: 10, kind: input, shape index: {}]
  %s11 = inlined_call_operand.hbm [shape: bf16[128,128], index: 11, kind: input, shape index: {}]
  %s12 = inlined_call_operand.hbm [shape: bf16[128,128], index: 12, kind: input, shape index: {}]
  %s13 = inlined_call_operand.vmem [shape: f32[1,128], index: 13, kind: input, shape index: {}]
  %s14 = inlined_call_operand.hbm [shape: f32[8,128], index: 14, kind: output, shape index: {}]
  %s15 = sld [smem:[#allocation0]]
  $region144: #{tpu_custom_call.1} parent=0
    _
  %s17 = ssub.s32 1, %s15
  %s18 = scalar_select 0, %s17, %s15
  %20 = dma.hbm_to_smem %s0, 16, [#allocation7], [#allocation6]
  %22 = dma.hbm_to_smem %s1, 16, [#allocation8], [#allocation6]
  %24 = dma.hbm_to_smem %s2, 16, [#allocation9], [#allocation6]
  %25 = dma.done [#allocation6], 48
  %26 = sfence
  $region1: #{tpu_custom_call.1} parent=0
    #allocation10 [shape = 'u8[32768]{0}', space=vmem, size = 0x8000, scoped, tag = 'input window, operand 6, single buffered']
    #allocation11 [shape = 's32[1]{0}', space=sflag, size = 0x4, scoped, tag = 'scoped memory for tpu_custom_call.1']
    #allocation12 [shape = 's32[1]{0}', space=sflag, size = 0x4, scoped, tag = 'scoped memory for tpu_custom_call.1']
    #allocation13 [shape = 'u8[32768]{0}', space=vmem, size = 0x8000, scoped, tag = 'input window, operand 7, single buffered']
    #allocation14 [shape = 's32[1]{0}', space=sflag, size = 0x4, scoped, tag = 'scoped memory for tpu_custom_call.1']
    #allocation15 [shape = 'u8[32768]{0}', space=vmem, size = 0x8000, scoped, tag = 'input window, operand 9, single buffered']
    #allocation16 [shape = 'u8[32768]{0}', space=vmem, size = 0x8000, scoped, tag = 'input window, operand 11, single buffered']
    #allocation17 [shape = 's32[1]{0}', space=sflag, size = 0x4, scoped, tag = 'scoped memory for tpu_custom_call.1']
    #allocation18 [shape = 'u8[32768]{0}', space=vmem, size = 0x8000, scoped, tag = 'input window, operand 12, single buffered']
    #allocation19 [shape = 'u8[4096]{0}', space=vmem, size = 0x1000, scoped, tag = 'output window, operand 0, single buffered']
    %27 = vsyncpa [#allocation11], 0
    %28 = vsyncpa [#allocation14], 0
    %29 = vsyncpa [#allocation17], 0
    %30 = vsyncpa [#allocation12], 0
    // Predicated region
    $region2: #{tpu_custom_call.1} parent=1 // pred_check
      _
    $region3: #{tpu_custom_call.1} parent=1 // pred_check_branch
      %32 = sbr.rel (0) target = $region5
    $region4: #{tpu_custom_call.1} parent=1 // pred_region
      _
    $region5: #{tpu_custom_call.1} parent=1 // pred_fallthru
      _
    // Predicated region
    $region6: #{tpu_custom_call.1} parent=1 // pred_check
      _
    $region7: #{tpu_custom_call.1} parent=1 // pred_check_branch
      %34 = sbr.rel (0) target = $region9
    $region8: #{tpu_custom_call.1} parent=1 // pred_region
      _
    $region9: #{tpu_custom_call.1} parent=1 // pred_fallthru
      _
    // Predicated region
    $region10: #{tpu_custom_call.1} parent=1 // pred_check
      _
    $region11: #{tpu_custom_call.1} parent=1 // pred_check_branch
      %36 = sbr.rel (0) target = $region13
    $region12: #{tpu_custom_call.1} parent=1 // pred_region
      _
    $region13: #{tpu_custom_call.1} parent=1 // pred_fallthru
      _
    // Predicated region
    $region14: #{tpu_custom_call.1} parent=1 // pred_check
      _
    $region15: #{tpu_custom_call.1} parent=1 // pred_check_branch
      %38 = sbr.rel (0) target = $region17
    $region16: #{tpu_custom_call.1} parent=1 // pred_region
      %s40 = ssub.s32 1024, 1024
      %41 = vsyncadd [#allocation11], %s40
      %s42 = sshll.u32 [#allocation10], 4
      %s43 = int_to_ptr.vmem [resolvable:$true] %s42
      %48 = dma.hbm_to_vmem [thread:$0]  %s6, 1024, %s43, [#allocation11], 64, 64, 4
    $region17: #{tpu_custom_call.1} parent=1 // pred_fallthru
      _
    // Predicated region
    $region18: #{tpu_custom_call.1} parent=1 // pred_check
      _
    $region19: #{tpu_custom_call.1} parent=1 // pred_check_branch
      %50 = sbr.rel (0) target = $region21
    $region20: #{tpu_custom_call.1} parent=1 // pred_region
      %s52 = ssub.s32 1024, 1024
      %53 = vsyncadd [#allocation14], %s52
      %s54 = sshll.u32 [#allocation13], 4
      %s55 = int_to_ptr.vmem [resolvable:$true] %s54
      %60 = dma.hbm_to_vmem [thread:$0]  %s7, 1024, %s55, [#allocation14], 64, 64, 4
    $region21: #{tpu_custom_call.1} parent=1 // pred_fallthru
      _
    // Predicated region
    $region22: #{tpu_custom_call.1} parent=1 // pred_check
      _
    $region23: #{tpu_custom_call.1} parent=1 // pred_check_branch
      %62 = sbr.rel (0) target = $region25
    $region24: #{tpu_custom_call.1} parent=1 // pred_region
      _
    $region25: #{tpu_custom_call.1} parent=1 // pred_fallthru
      _
    // Predicated region
    $region26: #{tpu_custom_call.1} parent=1 // pred_check
      _
    $region27: #{tpu_custom_call.1} parent=1 // pred_check_branch
      %64 = sbr.rel (0) target = $region29
    $region28: #{tpu_custom_call.1} parent=1 // pred_region
      %s66 = ssub.s32 1024, 1024
      %67 = vsyncadd [#allocation14], %s66
      %s68 = sshll.u32 [#allocation15], 4
      %s69 = int_to_ptr.vmem [resolvable:$true] %s68
      %74 = dma.hbm_to_vmem [thread:$0]  %s9, 1024, %s69, [#allocation14], 64, 64, 4
    $region29: #{tpu_custom_call.1} parent=1 // pred_fallthru
      _
    // Predicated region
    $region30: #{tpu_custom_call.1} parent=1 // pred_check
      _
    $region31: #{tpu_custom_call.1} parent=1 // pred_check_branch
      %76 = sbr.rel (0) target = $region33
    $region32: #{tpu_custom_call.1} parent=1 // pred_region
      _
    $region33: #{tpu_custom_call.1} parent=1 // pred_fallthru
      _
    // Predicated region
    $region34: #{tpu_custom_call.1} parent=1 // pred_check
      _
    $region35: #{tpu_custom_call.1} parent=1 // pred_check_branch
      %78 = sbr.rel (0) target = $region37
    $region36: #{tpu_custom_call.1} parent=1 // pred_region
      %s80 = ssub.s32 1024, 1024
      %81 = vsyncadd [#allocation17], %s80
      %s82 = sshll.u32 [#allocation16], 4
      %s83 = int_to_ptr.vmem [resolvable:$true] %s82
      %88 = dma.hbm_to_vmem [thread:$0]  %s11, 1024, %s83, [#allocation17], 64, 64, 4
    $region37: #{tpu_custom_call.1} parent=1 // pred_fallthru
      _
    // Predicated region
    $region38: #{tpu_custom_call.1} parent=1 // pred_check
      _
    $region39: #{tpu_custom_call.1} parent=1 // pred_check_branch
      %90 = sbr.rel (0) target = $region41
    $region40: #{tpu_custom_call.1} parent=1 // pred_region
      %s92 = ssub.s32 1024, 1024
      %93 = vsyncadd [#allocation17], %s92
      %s94 = sshll.u32 [#allocation18], 4
      %s95 = int_to_ptr.vmem [resolvable:$true] %s94
      %100 = dma.hbm_to_vmem [thread:$0]  %s12, 1024, %s95, [#allocation17], 64, 64, 4
    $region41: #{tpu_custom_call.1} parent=1 // pred_fallthru
      _
    // Predicated region
    $region42: #{tpu_custom_call.1} parent=1 // pred_check
      _
    $region43: #{tpu_custom_call.1} parent=1 // pred_check_branch
      %102 = sbr.rel (0) target = $region45
    $region44: #{tpu_custom_call.1} parent=1 // pred_region
      _
    $region45: #{tpu_custom_call.1} parent=1 // pred_fallthru
      _
    // Predicated region
    $region46: #{tpu_custom_call.1} parent=1 // pred_check
      _
    $region47: #{tpu_custom_call.1} parent=1 // pred_check_branch
      %104 = sbr.rel (0) target = $region49
    $region48: #{tpu_custom_call.1} parent=1 // pred_region
      %105 = dma.done [#allocation11], 1024
    $region49: #{tpu_custom_call.1} parent=1 // pred_fallthru
      _
    // Predicated region
    $region50: #{tpu_custom_call.1} parent=1 // pred_check
      _
    $region51: #{tpu_custom_call.1} parent=1 // pred_check_branch
      %107 = sbr.rel (0) target = $region53
    $region52: #{tpu_custom_call.1} parent=1 // pred_region
      %108 = dma.done [#allocation14], 1024
    $region53: #{tpu_custom_call.1} parent=1 // pred_fallthru
      _
    // Predicated region
    $region54: #{tpu_custom_call.1} parent=1 // pred_check
      _
    $region55: #{tpu_custom_call.1} parent=1 // pred_check_branch
      %110 = sbr.rel (0) target = $region57
    $region56: #{tpu_custom_call.1} parent=1 // pred_region
      %111 = dma.done [#allocation14], 1024
    $region57: #{tpu_custom_call.1} parent=1 // pred_fallthru
      _
    // Predicated region
    $region58: #{tpu_custom_call.1} parent=1 // pred_check
      _
    $region59: #{tpu_custom_call.1} parent=1 // pred_check_branch
      %113 = sbr.rel (0) target = $region61
    $region60: #{tpu_custom_call.1} parent=1 // pred_region
      %114 = dma.done [#allocation17], 1024
    $region61: #{tpu_custom_call.1} parent=1 // pred_fallthru
      _
    // Predicated region
    $region62: #{tpu_custom_call.1} parent=1 // pred_check
      _
    $region63: #{tpu_custom_call.1} parent=1 // pred_check_branch
      %116 = sbr.rel (0) target = $region65
    $region64: #{tpu_custom_call.1} parent=1 // pred_region
      %117 = dma.done [#allocation17], 1024
    $region65: #{tpu_custom_call.1} parent=1 // pred_fallthru
      _
    %119 = vst [vmem:[#allocation4] sm:$0xff] 0.0
    %120 = vst [vmem:[#allocation4 + $0x8] sm:$0xff] 0.0
    loop: start=0, step=1, limit=12
    $region66: #{tpu_custom_call.1} parent=1 // loop_pre_header
      _
    $region67: #{tpu_custom_call.1} parent=1 // loop_header
      %s122 = sphi 0, %s126
      %p123 = scmp.ge.s32.totalorder %s122, 12
    $region68: #{tpu_custom_call.1} parent=1 // loop_header_branch
      %125 = sbr.rel (%p123) target = $region72
    $region69: #{tpu_custom_call.1} parent=1 // loop_body
      %s127 = sld [smem:[#allocation7 + %s122]]
      %s128 = scalar_lea.vmem %s3, %s127
      %v129 = vld [vmem:[%s128] sm:$0x1]
      %s130 = scalar_lea.vmem [#allocation4], %s122
      %131 = vst [vmem:[%s130] sm:$0x1] %v129
    $region70: #{tpu_custom_call.1} parent=1 // loop_footer
      %s126 = sadd.s32 1, %s122
    $region71: #{tpu_custom_call.1} parent=1 // loop_footer_branch
      %121 = sbr.rel target = $region67
    $region72: #{tpu_custom_call.1} parent=1 // loop_exit
      _
    %v132 = vld [vmem:[#allocation4] sm:$0xff]
    %v133 = vld [vmem:[#allocation4 + $0x8] sm:$0xff]
    %v134 = vpack.c.bf16 %v133, %v132
    %v135 = vld [vmem:[#allocation10] sm:$0xf]
    %v136 = vld [vmem:[#allocation10 + $0x4] sm:$0xf]
    %v137 = vld [vmem:[#allocation10 + $0x8] sm:$0xf]
    %v138 = vld [vmem:[#allocation10 + $0xc] sm:$0xf]
    %v139 = vld [vmem:[#allocation10 + $0x10] sm:$0xf]
    %v140 = vld [vmem:[#allocation10 + $0x14] sm:$0xf]
    %v141 = vld [vmem:[#allocation10 + $0x18] sm:$0xf]
    %v142 = vld [vmem:[#allocation10 + $0x1c] sm:$0xf]
    %v143 = vld [vmem:[#allocation10 + $0x20] sm:$0xf]
    %v144 = vld [vmem:[#allocation10 + $0x24] sm:$0xf]
    %v145 = vld [vmem:[#allocation10 + $0x28] sm:$0xf]
    %v146 = vld [vmem:[#allocation10 + $0x2c] sm:$0xf]
    %v147 = vld [vmem:[#allocation10 + $0x30] sm:$0xf]
    %v148 = vld [vmem:[#allocation10 + $0x34] sm:$0xf]
    %v149 = vld [vmem:[#allocation10 + $0x38] sm:$0xf]
    %v150 = vld [vmem:[#allocation10 + $0x3c] sm:$0xf]
    %v151 = vld [vmem:[%s4] sm:$0xff]
    %v152 = vld [vmem:[%s4 + $0x8] sm:$0xff]
    %v153 = vpack.c.bf16 %v152, %v151
    %v154 = vld [vmem:[#allocation13] sm:$0xf]
    %v155 = vld [vmem:[#allocation13 + $0x4] sm:$0xf]
    %v156 = vld [vmem:[#allocation13 + $0x8] sm:$0xf]
    %v157 = vld [vmem:[#allocation13 + $0xc] sm:$0xf]
    %v158 = vld [vmem:[#allocation13 + $0x10] sm:$0xf]
    %v159 = vld [vmem:[#allocation13 + $0x14] sm:$0xf]
    %v160 = vld [vmem:[#allocation13 + $0x18] sm:$0xf]
    %v161 = vld [vmem:[#allocation13 + $0x1c] sm:$0xf]
    %v162 = vld [vmem:[#allocation13 + $0x20] sm:$0xf]
    %v163 = vld [vmem:[#allocation13 + $0x24] sm:$0xf]
    %v164 = vld [vmem:[#allocation13 + $0x28] sm:$0xf]
    %v165 = vld [vmem:[#allocation13 + $0x2c] sm:$0xf]
    %v166 = vld [vmem:[#allocation13 + $0x30] sm:$0xf]
    %v167 = vld [vmem:[#allocation13 + $0x34] sm:$0xf]
    %v168 = vld [vmem:[#allocation13 + $0x38] sm:$0xf]
    %v169 = vld [vmem:[#allocation13 + $0x3c] sm:$0xf]
    %v186 = vunpack.c.l.b16 %v154
    %v187 = vunpack.c.l.b16 %v155
    %v188 = vunpack.c.l.b16 %v156
    %v189 = vunpack.c.l.b16 %v157
    %v190 = vunpack.c.l.b16 %v158
    %v191 = vunpack.c.l.b16 %v159
    %v192 = vunpack.c.l.b16 %v160
    %v193 = vunpack.c.l.b16 %v161
    %v194 = vunpack.c.l.b16 %v162
    %v195 = vunpack.c.l.b16 %v163
    %v196 = vunpack.c.l.b16 %v164
    %v197 = vunpack.c.l.b16 %v165
    %v198 = vunpack.c.l.b16 %v166
    %v199 = vunpack.c.l.b16 %v167
    %v200 = vunpack.c.l.b16 %v168
    %v201 = vunpack.c.l.b16 %v169
    %v202 = vpack.c.b16 %v187, %v186
    %v203 = vpack.c.b16 %v189, %v188
    %v204 = vpack.c.b16 %v191, %v190
    %v205 = vpack.c.b16 %v193, %v192
    %v206 = vpack.c.b16 %v195, %v194
    %v207 = vpack.c.b16 %v197, %v196
    %v208 = vpack.c.b16 %v199, %v198
    %v209 = vpack.c.b16 %v201, %v200
    %218 = vmatprep.subr.bf16.mxu0 0
    %219 = vmatpush1.bf16.msra.mxu0 %v202
    %220 = vmatprep.subr.bf16.mxu0 0
    %221 = vmatpush1.bf16.msra.mxu0 %v203
    %222 = vmatprep.subr.bf16.mxu0 0
    %223 = vmatpush1.bf16.msra.mxu0 %v204
    %224 = vmatprep.subr.bf16.mxu0 0
    %225 = vmatpush1.bf16.msra.mxu0 %v205
    %226 = vmatprep.subr.bf16.mxu0 0
    %227 = vmatpush1.bf16.msra.mxu0 %v206
    %228 = vmatprep.subr.bf16.mxu0 0
    %229 = vmatpush1.bf16.msra.mxu0 %v207
    %230 = vmatprep.subr.bf16.mxu0 0
    %231 = vmatpush1.bf16.msra.mxu0 %v208
    %232 = vmatprep.subr.bf16.mxu0 0
    %233 = vmatpush1.bf16.msra.mxu0 %v209
    %234 = vmatprep.subr.bf16.mxu0 0
    %235 = vmatpush1.bf16.msra.mxu0 0
    %236 = vmatprep.subr.bf16.mxu0 0
    %237 = vmatpush1.bf16.msra.mxu0 0
    %238 = vmatprep.subr.bf16.mxu0 0
    %239 = vmatpush1.bf16.msra.mxu0 0
    %240 = vmatprep.subr.bf16.mxu0 0
    %241 = vmatpush1.bf16.msra.mxu0 0
    %242 = vmatprep.subr.bf16.mxu0 0
    %243 = vmatpush1.bf16.msra.mxu0 0
    %244 = vmatprep.subr.bf16.mxu0 0
    %245 = vmatpush1.bf16.msra.mxu0 0
    %246 = vmatprep.subr.bf16.mxu0 0
    %247 = vmatpush1.bf16.msra.mxu0 0
    %248 = vmatprep.subr.bf16.mxu0 0
    %249 = vmatpush1.bf16.msra.mxu0 0
    %250 = vmatprep.mubr.bf16.mxu0 0
    %251 = vmatmul.mubr.bf16.gmra.mrb[0].mxu0 %v153
    %v252 = vpop.f32.mrb[0].mxu0
    %v253 = vadd.f32 0.0, %v252
    %v254 = vpop.f32.mrb[0].mxu0
    %v255 = vpop.f32.mrb[0].mxu0
    %v256 = vadd.f32 0.0, %v255
    %v257 = vpop.f32.mrb[0].mxu0
    %258 = vdwg.mxu0
    %v275 = vunpack.c.l.b16 %v135
    %v276 = vunpack.c.l.b16 %v136
    %v277 = vunpack.c.l.b16 %v137
    %v278 = vunpack.c.l.b16 %v138
    %v279 = vunpack.c.l.b16 %v139
    %v280 = vunpack.c.l.b16 %v140
    %v281 = vunpack.c.l.b16 %v141
    %v282 = vunpack.c.l.b16 %v142
    %v283 = vunpack.c.l.b16 %v143
    %v284 = vunpack.c.l.b16 %v144
    %v285 = vunpack.c.l.b16 %v145
    %v286 = vunpack.c.l.b16 %v146
    %v287 = vunpack.c.l.b16 %v147
    %v288 = vunpack.c.l.b16 %v148
    %v289 = vunpack.c.l.b16 %v149
    %v290 = vunpack.c.l.b16 %v150
    %v291 = vpack.c.b16 %v276, %v275
    %v292 = vpack.c.b16 %v278, %v277
    %v293 = vpack.c.b16 %v280, %v279
    %v294 = vpack.c.b16 %v282, %v281
    %v295 = vpack.c.b16 %v284, %v283
    %v296 = vpack.c.b16 %v286, %v285
    %v297 = vpack.c.b16 %v288, %v287
    %v298 = vpack.c.b16 %v290, %v289
    %307 = vmatprep.subr.bf16.mxu0 0
    %308 = vmatpush1.bf16.msra.mxu0 %v291
    %309 = vmatprep.subr.bf16.mxu0 0
    %310 = vmatpush1.bf16.msra.mxu0 %v292
    %311 = vmatprep.subr.bf16.mxu0 0
    %312 = vmatpush1.bf16.msra.mxu0 %v293
    %313 = vmatprep.subr.bf16.mxu0 0
    %314 = vmatpush1.bf16.msra.mxu0 %v294
    %315 = vmatprep.subr.bf16.mxu0 0
    %316 = vmatpush1.bf16.msra.mxu0 %v295
    %317 = vmatprep.subr.bf16.mxu0 0
    %318 = vmatpush1.bf16.msra.mxu0 %v296
    %319 = vmatprep.subr.bf16.mxu0 0
    %320 = vmatpush1.bf16.msra.mxu0 %v297
    %321 = vmatprep.subr.bf16.mxu0 0
    %322 = vmatpush1.bf16.msra.mxu0 %v298
    %323 = vmatprep.subr.bf16.mxu0 0
    %324 = vmatpush1.bf16.msra.mxu0 0
    %325 = vmatprep.subr.bf16.mxu0 0
    %326 = vmatpush1.bf16.msra.mxu0 0
    %327 = vmatprep.subr.bf16.mxu0 0
    %328 = vmatpush1.bf16.msra.mxu0 0
    %329 = vmatprep.subr.bf16.mxu0 0
    %330 = vmatpush1.bf16.msra.mxu0 0
    %331 = vmatprep.subr.bf16.mxu0 0
    %332 = vmatpush1.bf16.msra.mxu0 0
    %333 = vmatprep.subr.bf16.mxu0 0
    %334 = vmatpush1.bf16.msra.mxu0 0
    %335 = vmatprep.subr.bf16.mxu0 0
    %336 = vmatpush1.bf16.msra.mxu0 0
    %337 = vmatprep.subr.bf16.mxu0 0
    %338 = vmatpush1.bf16.msra.mxu0 0
    %339 = vmatprep.mubr.bf16.mxu0 0
    %340 = vmatmul.mubr.bf16.gmra.mrb[0].mxu0 %v134
    %v341 = vpop.f32.mrb[0].mxu0
    %v342 = vadd.f32 %v253, %v341
    %v343 = vpop.f32.mrb[0].mxu0
    %v344 = vpop.f32.mrb[0].mxu0
    %v345 = vadd.f32 %v256, %v344
    %v346 = vpop.f32.mrb[0].mxu0
    %347 = vdwg.mxu0
    %v348 = vld [vmem:[%s8] sm:$0x1]
    %v350 = vlaneseq
    %v351 = vshrl.u32 %v350, 7
    %v352 = vsub.s32 0, %v351
    %v353 = vrot.slane %v348, %v352
    %v355 = vadd.f32 %v342, %v353
    %v356 = vadd.f32 %v345, %v353
    %357 = vst [vmem:[#allocation3] sm:$0xff] %v355
    %358 = vst [vmem:[#allocation3 + $0x8] sm:$0xff] %v356
    %v359 = vmax.f32 %v355, 0.0
    %v360 = vmax.f32 %v356, 0.0
    %361 = vst [vmem:[#allocation2] sm:$0xff] %v359
    %362 = vst [vmem:[#allocation2 + $0x8] sm:$0xff] %v360
    %363 = vst [vmem:[#allocation5] sm:$0xff] 0.0
    loop: start=0, step=1, limit=12
    $region73: #{tpu_custom_call.1} parent=1 // loop_pre_header
      _
    $region74: #{tpu_custom_call.1} parent=1 // loop_header
      %s365 = sphi 0, %s369
      %p366 = scmp.ge.s32.totalorder %s365, 12
    $region75: #{tpu_custom_call.1} parent=1 // loop_header_branch
      %368 = sbr.rel (%p366) target = $region79
    $region76: #{tpu_custom_call.1} parent=1 // loop_body
      %s370 = sld [smem:[#allocation8 + %s365]]
      %s371 = scalar_lea.vmem [#allocation5], %s370
      %v372 = vld [vmem:[%s371] sm:$0x1]
      %s373 = scalar_lea.vmem [#allocation2], %s365
      %v374 = vld [vmem:[%s373] sm:$0x1]
      %v375 = vadd.f32 %v372, %v374
      %376 = vst [vmem:[%s371] sm:$0x1] %v375
    $region77: #{tpu_custom_call.1} parent=1 // loop_footer
      %s369 = sadd.s32 1, %s365
    $region78: #{tpu_custom_call.1} parent=1 // loop_footer_branch
      %364 = sbr.rel target = $region74
    $region79: #{tpu_custom_call.1} parent=1 // loop_exit
      _
    loop: start=0, step=1, limit=12
    $region80: #{tpu_custom_call.1} parent=1 // loop_pre_header
      _
    $region81: #{tpu_custom_call.1} parent=1 // loop_header
      %s378 = sphi 0, %s382
      %p379 = scmp.ge.s32.totalorder %s378, 12
    $region82: #{tpu_custom_call.1} parent=1 // loop_header_branch
      %381 = sbr.rel (%p379) target = $region86
    $region83: #{tpu_custom_call.1} parent=1 // loop_body
      %s383 = sld [smem:[#allocation7 + %s378]]
      %s384 = sld [smem:[#allocation9 + %s378]]
      %p385 = scmp.ge.s32.totalorder %s384, 0
      %s386 = scalar_select %p385, 1, 0
      %s387 = scvt.s32.f32 %s386
      %p388 = scmp.gt.s32.totalorder %s384, 0
      %s389 = scalar_select %p388, %s384, 0
      %s390 = scalar_lea.vmem [#allocation5], %s383
      %v391 = vld [vmem:[%s390] sm:$0x1]
      %s392 = scalar_lea.vmem [#allocation2], %s389
      %v393 = vld [vmem:[%s392] sm:$0x1]
      %v394 = vstv %s387
      %v395 = vmul.f32 %v394, %v393
      %v396 = vsub.f32 %v391, %v395
      %s397 = scalar_lea.vmem [#allocation4], %s378
      %398 = vst [vmem:[%s397] sm:$0x1] %v396
    $region84: #{tpu_custom_call.1} parent=1 // loop_footer
      %s382 = sadd.s32 1, %s378
    $region85: #{tpu_custom_call.1} parent=1 // loop_footer_branch
      %377 = sbr.rel target = $region81
    $region86: #{tpu_custom_call.1} parent=1 // loop_exit
      _
    %v399 = vld [vmem:[#allocation4] sm:$0xff]
    %v400 = vld [vmem:[#allocation4 + $0x8] sm:$0xff]
    %v401 = vpack.c.bf16 %v400, %v399
    %v402 = vld [vmem:[#allocation15] sm:$0xf]
    %v403 = vld [vmem:[#allocation15 + $0x4] sm:$0xf]
    %v404 = vld [vmem:[#allocation15 + $0x8] sm:$0xf]
    %v405 = vld [vmem:[#allocation15 + $0xc] sm:$0xf]
    %v406 = vld [vmem:[#allocation15 + $0x10] sm:$0xf]
    %v407 = vld [vmem:[#allocation15 + $0x14] sm:$0xf]
    %v408 = vld [vmem:[#allocation15 + $0x18] sm:$0xf]
    %v409 = vld [vmem:[#allocation15 + $0x1c] sm:$0xf]
    %v410 = vld [vmem:[#allocation15 + $0x20] sm:$0xf]
    %v411 = vld [vmem:[#allocation15 + $0x24] sm:$0xf]
    %v412 = vld [vmem:[#allocation15 + $0x28] sm:$0xf]
    %v413 = vld [vmem:[#allocation15 + $0x2c] sm:$0xf]
    %v414 = vld [vmem:[#allocation15 + $0x30] sm:$0xf]
    %v415 = vld [vmem:[#allocation15 + $0x34] sm:$0xf]
    %v416 = vld [vmem:[#allocation15 + $0x38] sm:$0xf]
    %v417 = vld [vmem:[#allocation15 + $0x3c] sm:$0xf]
    %v418 = vld [vmem:[%s10] sm:$0x1]
    %v420 = vlaneseq
    %v421 = vshrl.u32 %v420, 7
    %v422 = vsub.s32 0, %v421
    %v423 = vrot.slane %v418, %v422
    %v441 = vunpack.c.l.b16 %v402
    %v442 = vunpack.c.l.b16 %v403
    %v443 = vunpack.c.l.b16 %v404
    %v444 = vunpack.c.l.b16 %v405
    %v445 = vunpack.c.l.b16 %v406
    %v446 = vunpack.c.l.b16 %v407
    %v447 = vunpack.c.l.b16 %v408
    %v448 = vunpack.c.l.b16 %v409
    %v449 = vunpack.c.l.b16 %v410
    %v450 = vunpack.c.l.b16 %v411
    %v451 = vunpack.c.l.b16 %v412
    %v452 = vunpack.c.l.b16 %v413
    %v453 = vunpack.c.l.b16 %v414
    %v454 = vunpack.c.l.b16 %v415
    %v455 = vunpack.c.l.b16 %v416
    %v456 = vunpack.c.l.b16 %v417
    %v457 = vpack.c.b16 %v442, %v441
    %v458 = vpack.c.b16 %v444, %v443
    %v459 = vpack.c.b16 %v446, %v445
    %v460 = vpack.c.b16 %v448, %v447
    %v461 = vpack.c.b16 %v450, %v449
    %v462 = vpack.c.b16 %v452, %v451
    %v463 = vpack.c.b16 %v454, %v453
    %v464 = vpack.c.b16 %v456, %v455
    %473 = vmatprep.subr.bf16.mxu0 0
    %474 = vmatpush1.bf16.msra.mxu0 %v457
    %475 = vmatprep.subr.bf16.mxu0 0
    %476 = vmatpush1.bf16.msra.mxu0 %v458
    %477 = vmatprep.subr.bf16.mxu0 0
    %478 = vmatpush1.bf16.msra.mxu0 %v459
    %479 = vmatprep.subr.bf16.mxu0 0
    %480 = vmatpush1.bf16.msra.mxu0 %v460
    %481 = vmatprep.subr.bf16.mxu0 0
    %482 = vmatpush1.bf16.msra.mxu0 %v461
    %483 = vmatprep.subr.bf16.mxu0 0
    %484 = vmatpush1.bf16.msra.mxu0 %v462
    %485 = vmatprep.subr.bf16.mxu0 0
    %486 = vmatpush1.bf16.msra.mxu0 %v463
    %487 = vmatprep.subr.bf16.mxu0 0
    %488 = vmatpush1.bf16.msra.mxu0 %v464
    %489 = vmatprep.subr.bf16.mxu0 0
    %490 = vmatpush1.bf16.msra.mxu0 0
    %491 = vmatprep.subr.bf16.mxu0 0
    %492 = vmatpush1.bf16.msra.mxu0 0
    %493 = vmatprep.subr.bf16.mxu0 0
    %494 = vmatpush1.bf16.msra.mxu0 0
    %495 = vmatprep.subr.bf16.mxu0 0
    %496 = vmatpush1.bf16.msra.mxu0 0
    %497 = vmatprep.subr.bf16.mxu0 0
    %498 = vmatpush1.bf16.msra.mxu0 0
    %499 = vmatprep.subr.bf16.mxu0 0
    %500 = vmatpush1.bf16.msra.mxu0 0
    %501 = vmatprep.subr.bf16.mxu0 0
    %502 = vmatpush1.bf16.msra.mxu0 0
    %503 = vmatprep.subr.bf16.mxu0 0
    %504 = vmatpush1.bf16.msra.mxu0 0
    %505 = vmatprep.mubr.bf16.mxu0 0
    %506 = vmatmul.mubr.bf16.gmra.mrb[0].mxu0 %v401
    %v507 = vpop.f32.mrb[0].mxu0
    %v508 = vadd.f32 %v423, %v507
    %v509 = vpop.f32.mrb[0].mxu0
    %v510 = vpop.f32.mrb[0].mxu0
    %v511 = vadd.f32 %v423, %v510
    %v512 = vpop.f32.mrb[0].mxu0
    %513 = vdwg.mxu0
    %v514 = vld [vmem:[#allocation3] sm:$0xff]
    %v515 = vld [vmem:[#allocation3 + $0x8] sm:$0xff]
    %v516 = vadd.f32 %v514, %v508
    %v517 = vadd.f32 %v515, %v511
    %v518 = vmax.f32 %v516, 0.0
    %v519 = vmax.f32 %v517, 0.0
    %520 = vst [vmem:[#allocation2] sm:$0xff] %v518
    %521 = vst [vmem:[#allocation2 + $0x8] sm:$0xff] %v519
    %522 = vst [vmem:[#allocation5] sm:$0xff] 0.0
    loop: start=0, step=1, limit=12
    $region87: #{tpu_custom_call.1} parent=1 // loop_pre_header
      _
    $region88: #{tpu_custom_call.1} parent=1 // loop_header
      %s524 = sphi 0, %s528
      %p525 = scmp.ge.s32.totalorder %s524, 12
    $region89: #{tpu_custom_call.1} parent=1 // loop_header_branch
      %527 = sbr.rel (%p525) target = $region93
    $region90: #{tpu_custom_call.1} parent=1 // loop_body
      %s529 = sld [smem:[#allocation8 + %s524]]
      %s530 = scalar_lea.vmem [#allocation5], %s529
      %v531 = vld [vmem:[%s530] sm:$0x1]
      %s532 = scalar_lea.vmem [#allocation2], %s524
      %v533 = vld [vmem:[%s532] sm:$0x1]
      %v534 = vadd.f32 %v531, %v533
      %535 = vst [vmem:[%s530] sm:$0x1] %v534
    $region91: #{tpu_custom_call.1} parent=1 // loop_footer
      %s528 = sadd.s32 1, %s524
    $region92: #{tpu_custom_call.1} parent=1 // loop_footer_branch
      %523 = sbr.rel target = $region88
    $region93: #{tpu_custom_call.1} parent=1 // loop_exit
      _
    loop: start=0, step=1, limit=12
    $region94: #{tpu_custom_call.1} parent=1 // loop_pre_header
      _
    $region95: #{tpu_custom_call.1} parent=1 // loop_header
      %s537 = sphi 0, %s541
      %p538 = scmp.ge.s32.totalorder %s537, 12
    $region96: #{tpu_custom_call.1} parent=1 // loop_header_branch
      %540 = sbr.rel (%p538) target = $region100
    $region97: #{tpu_custom_call.1} parent=1 // loop_body
      %s542 = sld [smem:[#allocation7 + %s537]]
      %s543 = sld [smem:[#allocation9 + %s537]]
      %p544 = scmp.ge.s32.totalorder %s543, 0
      %s545 = scalar_select %p544, 1, 0
      %s546 = scvt.s32.f32 %s545
      %p547 = scmp.gt.s32.totalorder %s543, 0
      %s548 = scalar_select %p547, %s543, 0
      %s549 = scalar_lea.vmem [#allocation5], %s542
      %v550 = vld [vmem:[%s549] sm:$0x1]
      %s551 = scalar_lea.vmem [#allocation2], %s548
      %v552 = vld [vmem:[%s551] sm:$0x1]
      %v553 = vstv %s546
      %v554 = vmul.f32 %v553, %v552
      %v555 = vsub.f32 %v550, %v554
      %s556 = scalar_lea.vmem [#allocation4], %s537
      %557 = vst [vmem:[%s556] sm:$0x1] %v555
    $region98: #{tpu_custom_call.1} parent=1 // loop_footer
      %s541 = sadd.s32 1, %s537
    $region99: #{tpu_custom_call.1} parent=1 // loop_footer_branch
      %536 = sbr.rel target = $region95
    $region100: #{tpu_custom_call.1} parent=1 // loop_exit
      _
    %v558 = vld [vmem:[#allocation4] sm:$0xff]
    %v559 = vld [vmem:[#allocation4 + $0x8] sm:$0xff]
    %v560 = vpack.c.bf16 %v559, %v558
    %v561 = vld [vmem:[#allocation15] sm:$0xf]
    %v562 = vld [vmem:[#allocation15 + $0x4] sm:$0xf]
    %v563 = vld [vmem:[#allocation15 + $0x8] sm:$0xf]
    %v564 = vld [vmem:[#allocation15 + $0xc] sm:$0xf]
    %v565 = vld [vmem:[#allocation15 + $0x10] sm:$0xf]
    %v566 = vld [vmem:[#allocation15 + $0x14] sm:$0xf]
    %v567 = vld [vmem:[#allocation15 + $0x18] sm:$0xf]
    %v568 = vld [vmem:[#allocation15 + $0x1c] sm:$0xf]
    %v569 = vld [vmem:[#allocation15 + $0x20] sm:$0xf]
    %v570 = vld [vmem:[#allocation15 + $0x24] sm:$0xf]
    %v571 = vld [vmem:[#allocation15 + $0x28] sm:$0xf]
    %v572 = vld [vmem:[#allocation15 + $0x2c] sm:$0xf]
    %v573 = vld [vmem:[#allocation15 + $0x30] sm:$0xf]
    %v574 = vld [vmem:[#allocation15 + $0x34] sm:$0xf]
    %v575 = vld [vmem:[#allocation15 + $0x38] sm:$0xf]
    %v576 = vld [vmem:[#allocation15 + $0x3c] sm:$0xf]
    %v577 = vld [vmem:[%s10] sm:$0x1]
    %v579 = vlaneseq
    %v580 = vshrl.u32 %v579, 7
    %v581 = vsub.s32 0, %v580
    %v582 = vrot.slane %v577, %v581
    %v600 = vunpack.c.l.b16 %v561
    %v601 = vunpack.c.l.b16 %v562
    %v602 = vunpack.c.l.b16 %v563
    %v603 = vunpack.c.l.b16 %v564
    %v604 = vunpack.c.l.b16 %v565
    %v605 = vunpack.c.l.b16 %v566
    %v606 = vunpack.c.l.b16 %v567
    %v607 = vunpack.c.l.b16 %v568
    %v608 = vunpack.c.l.b16 %v569
    %v609 = vunpack.c.l.b16 %v570
    %v610 = vunpack.c.l.b16 %v571
    %v611 = vunpack.c.l.b16 %v572
    %v612 = vunpack.c.l.b16 %v573
    %v613 = vunpack.c.l.b16 %v574
    %v614 = vunpack.c.l.b16 %v575
    %v615 = vunpack.c.l.b16 %v576
    %v616 = vpack.c.b16 %v601, %v600
    %v617 = vpack.c.b16 %v603, %v602
    %v618 = vpack.c.b16 %v605, %v604
    %v619 = vpack.c.b16 %v607, %v606
    %v620 = vpack.c.b16 %v609, %v608
    %v621 = vpack.c.b16 %v611, %v610
    %v622 = vpack.c.b16 %v613, %v612
    %v623 = vpack.c.b16 %v615, %v614
    %632 = vmatprep.subr.bf16.mxu0 0
    %633 = vmatpush1.bf16.msra.mxu0 %v616
    %634 = vmatprep.subr.bf16.mxu0 0
    %635 = vmatpush1.bf16.msra.mxu0 %v617
    %636 = vmatprep.subr.bf16.mxu0 0
    %637 = vmatpush1.bf16.msra.mxu0 %v618
    %638 = vmatprep.subr.bf16.mxu0 0
    %639 = vmatpush1.bf16.msra.mxu0 %v619
    %640 = vmatprep.subr.bf16.mxu0 0
    %641 = vmatpush1.bf16.msra.mxu0 %v620
    %642 = vmatprep.subr.bf16.mxu0 0
    %643 = vmatpush1.bf16.msra.mxu0 %v621
    %644 = vmatprep.subr.bf16.mxu0 0
    %645 = vmatpush1.bf16.msra.mxu0 %v622
    %646 = vmatprep.subr.bf16.mxu0 0
    %647 = vmatpush1.bf16.msra.mxu0 %v623
    %648 = vmatprep.subr.bf16.mxu0 0
    %649 = vmatpush1.bf16.msra.mxu0 0
    %650 = vmatprep.subr.bf16.mxu0 0
    %651 = vmatpush1.bf16.msra.mxu0 0
    %652 = vmatprep.subr.bf16.mxu0 0
    %653 = vmatpush1.bf16.msra.mxu0 0
    %654 = vmatprep.subr.bf16.mxu0 0
    %655 = vmatpush1.bf16.msra.mxu0 0
    %656 = vmatprep.subr.bf16.mxu0 0
    %657 = vmatpush1.bf16.msra.mxu0 0
    %658 = vmatprep.subr.bf16.mxu0 0
    %659 = vmatpush1.bf16.msra.mxu0 0
    %660 = vmatprep.subr.bf16.mxu0 0
    %661 = vmatpush1.bf16.msra.mxu0 0
    %662 = vmatprep.subr.bf16.mxu0 0
    %663 = vmatpush1.bf16.msra.mxu0 0
    %664 = vmatprep.mubr.bf16.mxu0 0
    %665 = vmatmul.mubr.bf16.gmra.mrb[0].mxu0 %v560
    %v666 = vpop.f32.mrb[0].mxu0
    %v667 = vadd.f32 %v582, %v666
    %v668 = vpop.f32.mrb[0].mxu0
    %v669 = vpop.f32.mrb[0].mxu0
    %v670 = vadd.f32 %v582, %v669
    %v671 = vpop.f32.mrb[0].mxu0
    %672 = vdwg.mxu0
    %v673 = vld [vmem:[#allocation3] sm:$0xff]
    %v674 = vld [vmem:[#allocation3 + $0x8] sm:$0xff]
    %v675 = vadd.f32 %v673, %v667
    %v676 = vadd.f32 %v674, %v670
    %v677 = vmax.f32 %v675, 0.0
    %v678 = vmax.f32 %v676, 0.0
    %679 = vst [vmem:[#allocation2] sm:$0xff] %v677
    %680 = vst [vmem:[#allocation2 + $0x8] sm:$0xff] %v678
    %681 = vst [vmem:[#allocation5] sm:$0xff] 0.0
    loop: start=0, step=1, limit=12
    $region101: #{tpu_custom_call.1} parent=1 // loop_pre_header
      _
    $region102: #{tpu_custom_call.1} parent=1 // loop_header
      %s683 = sphi 0, %s687
      %p684 = scmp.ge.s32.totalorder %s683, 12
    $region103: #{tpu_custom_call.1} parent=1 // loop_header_branch
      %686 = sbr.rel (%p684) target = $region107
    $region104: #{tpu_custom_call.1} parent=1 // loop_body
      %s688 = sld [smem:[#allocation8 + %s683]]
      %s689 = scalar_lea.vmem [#allocation5], %s688
      %v690 = vld [vmem:[%s689] sm:$0x1]
      %s691 = scalar_lea.vmem [#allocation2], %s683
      %v692 = vld [vmem:[%s691] sm:$0x1]
      %v693 = vadd.f32 %v690, %v692
      %694 = vst [vmem:[%s689] sm:$0x1] %v693
    $region105: #{tpu_custom_call.1} parent=1 // loop_footer
      %s687 = sadd.s32 1, %s683
    $region106: #{tpu_custom_call.1} parent=1 // loop_footer_branch
      %682 = sbr.rel target = $region102
    $region107: #{tpu_custom_call.1} parent=1 // loop_exit
      _
    loop: start=0, step=1, limit=12
    $region108: #{tpu_custom_call.1} parent=1 // loop_pre_header
      _
    $region109: #{tpu_custom_call.1} parent=1 // loop_header
      %s696 = sphi 0, %s700
      %p697 = scmp.ge.s32.totalorder %s696, 12
    $region110: #{tpu_custom_call.1} parent=1 // loop_header_branch
      %699 = sbr.rel (%p697) target = $region114
    $region111: #{tpu_custom_call.1} parent=1 // loop_body
      %s701 = sld [smem:[#allocation7 + %s696]]
      %s702 = sld [smem:[#allocation9 + %s696]]
      %p703 = scmp.ge.s32.totalorder %s702, 0
      %s704 = scalar_select %p703, 1, 0
      %s705 = scvt.s32.f32 %s704
      %p706 = scmp.gt.s32.totalorder %s702, 0
      %s707 = scalar_select %p706, %s702, 0
      %s708 = scalar_lea.vmem [#allocation5], %s701
      %v709 = vld [vmem:[%s708] sm:$0x1]
      %s710 = scalar_lea.vmem [#allocation2], %s707
      %v711 = vld [vmem:[%s710] sm:$0x1]
      %v712 = vstv %s705
      %v713 = vmul.f32 %v712, %v711
      %v714 = vsub.f32 %v709, %v713
      %s715 = scalar_lea.vmem [#allocation4], %s696
      %716 = vst [vmem:[%s715] sm:$0x1] %v714
    $region112: #{tpu_custom_call.1} parent=1 // loop_footer
      %s700 = sadd.s32 1, %s696
    $region113: #{tpu_custom_call.1} parent=1 // loop_footer_branch
      %695 = sbr.rel target = $region109
    $region114: #{tpu_custom_call.1} parent=1 // loop_exit
      _
    %v717 = vld [vmem:[#allocation4] sm:$0xff]
    %v718 = vld [vmem:[#allocation4 + $0x8] sm:$0xff]
    %v719 = vpack.c.bf16 %v718, %v717
    %v720 = vld [vmem:[#allocation15] sm:$0xf]
    %v721 = vld [vmem:[#allocation15 + $0x4] sm:$0xf]
    %v722 = vld [vmem:[#allocation15 + $0x8] sm:$0xf]
    %v723 = vld [vmem:[#allocation15 + $0xc] sm:$0xf]
    %v724 = vld [vmem:[#allocation15 + $0x10] sm:$0xf]
    %v725 = vld [vmem:[#allocation15 + $0x14] sm:$0xf]
    %v726 = vld [vmem:[#allocation15 + $0x18] sm:$0xf]
    %v727 = vld [vmem:[#allocation15 + $0x1c] sm:$0xf]
    %v728 = vld [vmem:[#allocation15 + $0x20] sm:$0xf]
    %v729 = vld [vmem:[#allocation15 + $0x24] sm:$0xf]
    %v730 = vld [vmem:[#allocation15 + $0x28] sm:$0xf]
    %v731 = vld [vmem:[#allocation15 + $0x2c] sm:$0xf]
    %v732 = vld [vmem:[#allocation15 + $0x30] sm:$0xf]
    %v733 = vld [vmem:[#allocation15 + $0x34] sm:$0xf]
    %v734 = vld [vmem:[#allocation15 + $0x38] sm:$0xf]
    %v735 = vld [vmem:[#allocation15 + $0x3c] sm:$0xf]
    %v736 = vld [vmem:[%s10] sm:$0x1]
    %v738 = vlaneseq
    %v739 = vshrl.u32 %v738, 7
    %v740 = vsub.s32 0, %v739
    %v741 = vrot.slane %v736, %v740
    %v759 = vunpack.c.l.b16 %v720
    %v760 = vunpack.c.l.b16 %v721
    %v761 = vunpack.c.l.b16 %v722
    %v762 = vunpack.c.l.b16 %v723
    %v763 = vunpack.c.l.b16 %v724
    %v764 = vunpack.c.l.b16 %v725
    %v765 = vunpack.c.l.b16 %v726
    %v766 = vunpack.c.l.b16 %v727
    %v767 = vunpack.c.l.b16 %v728
    %v768 = vunpack.c.l.b16 %v729
    %v769 = vunpack.c.l.b16 %v730
    %v770 = vunpack.c.l.b16 %v731
    %v771 = vunpack.c.l.b16 %v732
    %v772 = vunpack.c.l.b16 %v733
    %v773 = vunpack.c.l.b16 %v734
    %v774 = vunpack.c.l.b16 %v735
    %v775 = vpack.c.b16 %v760, %v759
    %v776 = vpack.c.b16 %v762, %v761
    %v777 = vpack.c.b16 %v764, %v763
    %v778 = vpack.c.b16 %v766, %v765
    %v779 = vpack.c.b16 %v768, %v767
    %v780 = vpack.c.b16 %v770, %v769
    %v781 = vpack.c.b16 %v772, %v771
    %v782 = vpack.c.b16 %v774, %v773
    %791 = vmatprep.subr.bf16.mxu0 0
    %792 = vmatpush1.bf16.msra.mxu0 %v775
    %793 = vmatprep.subr.bf16.mxu0 0
    %794 = vmatpush1.bf16.msra.mxu0 %v776
    %795 = vmatprep.subr.bf16.mxu0 0
    %796 = vmatpush1.bf16.msra.mxu0 %v777
    %797 = vmatprep.subr.bf16.mxu0 0
    %798 = vmatpush1.bf16.msra.mxu0 %v778
    %799 = vmatprep.subr.bf16.mxu0 0
    %800 = vmatpush1.bf16.msra.mxu0 %v779
    %801 = vmatprep.subr.bf16.mxu0 0
    %802 = vmatpush1.bf16.msra.mxu0 %v780
    %803 = vmatprep.subr.bf16.mxu0 0
    %804 = vmatpush1.bf16.msra.mxu0 %v781
    %805 = vmatprep.subr.bf16.mxu0 0
    %806 = vmatpush1.bf16.msra.mxu0 %v782
    %807 = vmatprep.subr.bf16.mxu0 0
    %808 = vmatpush1.bf16.msra.mxu0 0
    %809 = vmatprep.subr.bf16.mxu0 0
    %810 = vmatpush1.bf16.msra.mxu0 0
    %811 = vmatprep.subr.bf16.mxu0 0
    %812 = vmatpush1.bf16.msra.mxu0 0
    %813 = vmatprep.subr.bf16.mxu0 0
    %814 = vmatpush1.bf16.msra.mxu0 0
    %815 = vmatprep.subr.bf16.mxu0 0
    %816 = vmatpush1.bf16.msra.mxu0 0
    %817 = vmatprep.subr.bf16.mxu0 0
    %818 = vmatpush1.bf16.msra.mxu0 0
    %819 = vmatprep.subr.bf16.mxu0 0
    %820 = vmatpush1.bf16.msra.mxu0 0
    %821 = vmatprep.subr.bf16.mxu0 0
    %822 = vmatpush1.bf16.msra.mxu0 0
    %823 = vmatprep.mubr.bf16.mxu0 0
    %824 = vmatmul.mubr.bf16.gmra.mrb[0].mxu0 %v719
    %v825 = vpop.f32.mrb[0].mxu0
    %v826 = vadd.f32 %v741, %v825
    %v827 = vpop.f32.mrb[0].mxu0
    %v828 = vpop.f32.mrb[0].mxu0
    %v829 = vadd.f32 %v741, %v828
    %v830 = vpop.f32.mrb[0].mxu0
    %831 = vdwg.mxu0
    %v832 = vld [vmem:[#allocation3] sm:$0xff]
    %v833 = vld [vmem:[#allocation3 + $0x8] sm:$0xff]
    %v834 = vadd.f32 %v832, %v826
    %v835 = vadd.f32 %v833, %v829
    %v836 = vmax.f32 %v834, 0.0
    %v837 = vmax.f32 %v835, 0.0
    %838 = vst [vmem:[#allocation2] sm:$0xff] %v836
    %839 = vst [vmem:[#allocation2 + $0x8] sm:$0xff] %v837
    %840 = vst [vmem:[#allocation5] sm:$0xff] 0.0
    loop: start=0, step=1, limit=12
    $region115: #{tpu_custom_call.1} parent=1 // loop_pre_header
      _
    $region116: #{tpu_custom_call.1} parent=1 // loop_header
      %s842 = sphi 0, %s846
      %p843 = scmp.ge.s32.totalorder %s842, 12
    $region117: #{tpu_custom_call.1} parent=1 // loop_header_branch
      %845 = sbr.rel (%p843) target = $region121
    $region118: #{tpu_custom_call.1} parent=1 // loop_body
      %s847 = sld [smem:[#allocation8 + %s842]]
      %s848 = scalar_lea.vmem [#allocation5], %s847
      %v849 = vld [vmem:[%s848] sm:$0x1]
      %s850 = scalar_lea.vmem [#allocation2], %s842
      %v851 = vld [vmem:[%s850] sm:$0x1]
      %v852 = vadd.f32 %v849, %v851
      %853 = vst [vmem:[%s848] sm:$0x1] %v852
    $region119: #{tpu_custom_call.1} parent=1 // loop_footer
      %s846 = sadd.s32 1, %s842
    $region120: #{tpu_custom_call.1} parent=1 // loop_footer_branch
      %841 = sbr.rel target = $region116
    $region121: #{tpu_custom_call.1} parent=1 // loop_exit
      _
    loop: start=0, step=1, limit=12
    $region122: #{tpu_custom_call.1} parent=1 // loop_pre_header
      _
    $region123: #{tpu_custom_call.1} parent=1 // loop_header
      %s855 = sphi 0, %s859
      %p856 = scmp.ge.s32.totalorder %s855, 12
    $region124: #{tpu_custom_call.1} parent=1 // loop_header_branch
      %858 = sbr.rel (%p856) target = $region128
    $region125: #{tpu_custom_call.1} parent=1 // loop_body
      %s860 = sld [smem:[#allocation7 + %s855]]
      %s861 = sld [smem:[#allocation9 + %s855]]
      %p862 = scmp.ge.s32.totalorder %s861, 0
      %s863 = scalar_select %p862, 1, 0
      %s864 = scvt.s32.f32 %s863
      %p865 = scmp.gt.s32.totalorder %s861, 0
      %s866 = scalar_select %p865, %s861, 0
      %s867 = scalar_lea.vmem [#allocation5], %s860
      %v868 = vld [vmem:[%s867] sm:$0x1]
      %s869 = scalar_lea.vmem [#allocation2], %s866
      %v870 = vld [vmem:[%s869] sm:$0x1]
      %v871 = vstv %s864
      %v872 = vmul.f32 %v871, %v870
      %v873 = vsub.f32 %v868, %v872
      %s874 = scalar_lea.vmem [#allocation4], %s855
      %875 = vst [vmem:[%s874] sm:$0x1] %v873
    $region126: #{tpu_custom_call.1} parent=1 // loop_footer
      %s859 = sadd.s32 1, %s855
    $region127: #{tpu_custom_call.1} parent=1 // loop_footer_branch
      %854 = sbr.rel target = $region123
    $region128: #{tpu_custom_call.1} parent=1 // loop_exit
      _
    %v876 = vld [vmem:[#allocation4] sm:$0xff]
    %v877 = vld [vmem:[#allocation4 + $0x8] sm:$0xff]
    %v878 = vpack.c.bf16 %v877, %v876
    %v879 = vld [vmem:[#allocation15] sm:$0xf]
    %v880 = vld [vmem:[#allocation15 + $0x4] sm:$0xf]
    %v881 = vld [vmem:[#allocation15 + $0x8] sm:$0xf]
    %v882 = vld [vmem:[#allocation15 + $0xc] sm:$0xf]
    %v883 = vld [vmem:[#allocation15 + $0x10] sm:$0xf]
    %v884 = vld [vmem:[#allocation15 + $0x14] sm:$0xf]
    %v885 = vld [vmem:[#allocation15 + $0x18] sm:$0xf]
    %v886 = vld [vmem:[#allocation15 + $0x1c] sm:$0xf]
    %v887 = vld [vmem:[#allocation15 + $0x20] sm:$0xf]
    %v888 = vld [vmem:[#allocation15 + $0x24] sm:$0xf]
    %v889 = vld [vmem:[#allocation15 + $0x28] sm:$0xf]
    %v890 = vld [vmem:[#allocation15 + $0x2c] sm:$0xf]
    %v891 = vld [vmem:[#allocation15 + $0x30] sm:$0xf]
    %v892 = vld [vmem:[#allocation15 + $0x34] sm:$0xf]
    %v893 = vld [vmem:[#allocation15 + $0x38] sm:$0xf]
    %v894 = vld [vmem:[#allocation15 + $0x3c] sm:$0xf]
    %v895 = vld [vmem:[%s10] sm:$0x1]
    %v897 = vlaneseq
    %v898 = vshrl.u32 %v897, 7
    %v899 = vsub.s32 0, %v898
    %v900 = vrot.slane %v895, %v899
    %v918 = vunpack.c.l.b16 %v879
    %v919 = vunpack.c.l.b16 %v880
    %v920 = vunpack.c.l.b16 %v881
    %v921 = vunpack.c.l.b16 %v882
    %v922 = vunpack.c.l.b16 %v883
    %v923 = vunpack.c.l.b16 %v884
    %v924 = vunpack.c.l.b16 %v885
    %v925 = vunpack.c.l.b16 %v886
    %v926 = vunpack.c.l.b16 %v887
    %v927 = vunpack.c.l.b16 %v888
    %v928 = vunpack.c.l.b16 %v889
    %v929 = vunpack.c.l.b16 %v890
    %v930 = vunpack.c.l.b16 %v891
    %v931 = vunpack.c.l.b16 %v892
    %v932 = vunpack.c.l.b16 %v893
    %v933 = vunpack.c.l.b16 %v894
    %v934 = vpack.c.b16 %v919, %v918
    %v935 = vpack.c.b16 %v921, %v920
    %v936 = vpack.c.b16 %v923, %v922
    %v937 = vpack.c.b16 %v925, %v924
    %v938 = vpack.c.b16 %v927, %v926
    %v939 = vpack.c.b16 %v929, %v928
    %v940 = vpack.c.b16 %v931, %v930
    %v941 = vpack.c.b16 %v933, %v932
    %950 = vmatprep.subr.bf16.mxu0 0
    %951 = vmatpush1.bf16.msra.mxu0 %v934
    %952 = vmatprep.subr.bf16.mxu0 0
    %953 = vmatpush1.bf16.msra.mxu0 %v935
    %954 = vmatprep.subr.bf16.mxu0 0
    %955 = vmatpush1.bf16.msra.mxu0 %v936
    %956 = vmatprep.subr.bf16.mxu0 0
    %957 = vmatpush1.bf16.msra.mxu0 %v937
    %958 = vmatprep.subr.bf16.mxu0 0
    %959 = vmatpush1.bf16.msra.mxu0 %v938
    %960 = vmatprep.subr.bf16.mxu0 0
    %961 = vmatpush1.bf16.msra.mxu0 %v939
    %962 = vmatprep.subr.bf16.mxu0 0
    %963 = vmatpush1.bf16.msra.mxu0 %v940
    %964 = vmatprep.subr.bf16.mxu0 0
    %965 = vmatpush1.bf16.msra.mxu0 %v941
    %966 = vmatprep.subr.bf16.mxu0 0
    %967 = vmatpush1.bf16.msra.mxu0 0
    %968 = vmatprep.subr.bf16.mxu0 0
    %969 = vmatpush1.bf16.msra.mxu0 0
    %970 = vmatprep.subr.bf16.mxu0 0
    %971 = vmatpush1.bf16.msra.mxu0 0
    %972 = vmatprep.subr.bf16.mxu0 0
    %973 = vmatpush1.bf16.msra.mxu0 0
    %974 = vmatprep.subr.bf16.mxu0 0
    %975 = vmatpush1.bf16.msra.mxu0 0
    %976 = vmatprep.subr.bf16.mxu0 0
    %977 = vmatpush1.bf16.msra.mxu0 0
    %978 = vmatprep.subr.bf16.mxu0 0
    %979 = vmatpush1.bf16.msra.mxu0 0
    %980 = vmatprep.subr.bf16.mxu0 0
    %981 = vmatpush1.bf16.msra.mxu0 0
    %982 = vmatprep.mubr.bf16.mxu0 0
    %983 = vmatmul.mubr.bf16.gmra.mrb[0].mxu0 %v878
    %v984 = vpop.f32.mrb[0].mxu0
    %v985 = vadd.f32 %v900, %v984
    %v986 = vpop.f32.mrb[0].mxu0
    %v987 = vpop.f32.mrb[0].mxu0
    %v988 = vadd.f32 %v900, %v987
    %v989 = vpop.f32.mrb[0].mxu0
    %990 = vdwg.mxu0
    %v991 = vld [vmem:[#allocation3] sm:$0xff]
    %v992 = vld [vmem:[#allocation3 + $0x8] sm:$0xff]
    %v993 = vadd.f32 %v991, %v985
    %v994 = vadd.f32 %v992, %v988
    %v995 = vmax.f32 %v993, 0.0
    %v996 = vmax.f32 %v994, 0.0
    %997 = vst [vmem:[#allocation2] sm:$0xff] %v995
    %998 = vst [vmem:[#allocation2 + $0x8] sm:$0xff] %v996
    %999 = vst [vmem:[#allocation5] sm:$0xff] 0.0
    loop: start=0, step=1, limit=12
    $region129: #{tpu_custom_call.1} parent=1 // loop_pre_header
      _
    $region130: #{tpu_custom_call.1} parent=1 // loop_header
      %s1001 = sphi 0, %s1005
      %p1002 = scmp.ge.s32.totalorder %s1001, 12
    $region131: #{tpu_custom_call.1} parent=1 // loop_header_branch
      %1004 = sbr.rel (%p1002) target = $region135
    $region132: #{tpu_custom_call.1} parent=1 // loop_body
      %s1006 = sld [smem:[#allocation8 + %s1001]]
      %s1007 = scalar_lea.vmem [#allocation5], %s1006
      %v1008 = vld [vmem:[%s1007] sm:$0x1]
      %s1009 = scalar_lea.vmem [#allocation2], %s1001
      %v1010 = vld [vmem:[%s1009] sm:$0x1]
      %v1011 = vadd.f32 %v1008, %v1010
      %1012 = vst [vmem:[%s1007] sm:$0x1] %v1011
    $region133: #{tpu_custom_call.1} parent=1 // loop_footer
      %s1005 = sadd.s32 1, %s1001
    $region134: #{tpu_custom_call.1} parent=1 // loop_footer_branch
      %1000 = sbr.rel target = $region130
    $region135: #{tpu_custom_call.1} parent=1 // loop_exit
      _
    %v1013 = vld [vmem:[%s3] sm:$0xff]
    %v1014 = vld [vmem:[%s5] sm:$0xff]
    %vm1015 = vcmp.gt.f32.partialorder %v1014, 0.0
    %v1016 = vsel %vm1015, 1, 0
    %v1017 = vcvt.s32.f32 %v1016
    %v1018 = vld [vmem:[#allocation5] sm:$0xff]
    %1020 = vset.pattern.permute.xlu0 0
    %1021 = vperm.xlu0 %1020, %v1017
    %v1022 = vpop.permute.xlu0 %1021
    %v1024 = vmul.f32 %v1018, %v1022
    %v1025 = vsub.f32 1.0, %v1017
    %1027 = vset.pattern.permute.xlu0 0
    %1028 = vperm.xlu0 %1027, %v1025
    %v1029 = vpop.permute.xlu0 %1028
    %v1031 = vmul.f32 %v1013, %v1029
    %v1032 = vadd.f32 %v1024, %v1031
    %v1033 = vpack.c.bf16 %v1013, %v1013
    %v1034 = vld [vmem:[#allocation16] sm:$0xf]
    %v1035 = vld [vmem:[#allocation16 + $0x4] sm:$0xf]
    %v1036 = vld [vmem:[#allocation16 + $0x8] sm:$0xf]
    %v1037 = vld [vmem:[#allocation16 + $0xc] sm:$0xf]
    %v1038 = vld [vmem:[#allocation16 + $0x10] sm:$0xf]
    %v1039 = vld [vmem:[#allocation16 + $0x14] sm:$0xf]
    %v1040 = vld [vmem:[#allocation16 + $0x18] sm:$0xf]
    %v1041 = vld [vmem:[#allocation16 + $0x1c] sm:$0xf]
    %v1042 = vld [vmem:[#allocation16 + $0x20] sm:$0xf]
    %v1043 = vld [vmem:[#allocation16 + $0x24] sm:$0xf]
    %v1044 = vld [vmem:[#allocation16 + $0x28] sm:$0xf]
    %v1045 = vld [vmem:[#allocation16 + $0x2c] sm:$0xf]
    %v1046 = vld [vmem:[#allocation16 + $0x30] sm:$0xf]
    %v1047 = vld [vmem:[#allocation16 + $0x34] sm:$0xf]
    %v1048 = vld [vmem:[#allocation16 + $0x38] sm:$0xf]
    %v1049 = vld [vmem:[#allocation16 + $0x3c] sm:$0xf]
    %v1050 = vpack.c.bf16 %v1032, %v1032
    %v1051 = vld [vmem:[#allocation18] sm:$0xf]
    %v1052 = vld [vmem:[#allocation18 + $0x4] sm:$0xf]
    %v1053 = vld [vmem:[#allocation18 + $0x8] sm:$0xf]
    %v1054 = vld [vmem:[#allocation18 + $0xc] sm:$0xf]
    %v1055 = vld [vmem:[#allocation18 + $0x10] sm:$0xf]
    %v1056 = vld [vmem:[#allocation18 + $0x14] sm:$0xf]
    %v1057 = vld [vmem:[#allocation18 + $0x18] sm:$0xf]
    %v1058 = vld [vmem:[#allocation18 + $0x1c] sm:$0xf]
    %v1059 = vld [vmem:[#allocation18 + $0x20] sm:$0xf]
    %v1060 = vld [vmem:[#allocation18 + $0x24] sm:$0xf]
    %v1061 = vld [vmem:[#allocation18 + $0x28] sm:$0xf]
    %v1062 = vld [vmem:[#allocation18 + $0x2c] sm:$0xf]
    %v1063 = vld [vmem:[#allocation18 + $0x30] sm:$0xf]
    %v1064 = vld [vmem:[#allocation18 + $0x34] sm:$0xf]
    %v1065 = vld [vmem:[#allocation18 + $0x38] sm:$0xf]
    %v1066 = vld [vmem:[#allocation18 + $0x3c] sm:$0xf]
    %v1083 = vunpack.c.l.b16 %v1051
    %v1084 = vunpack.c.l.b16 %v1052
    %v1085 = vunpack.c.l.b16 %v1053
    %v1086 = vunpack.c.l.b16 %v1054
    %v1087 = vunpack.c.l.b16 %v1055
    %v1088 = vunpack.c.l.b16 %v1056
    %v1089 = vunpack.c.l.b16 %v1057
    %v1090 = vunpack.c.l.b16 %v1058
    %v1091 = vunpack.c.l.b16 %v1059
    %v1092 = vunpack.c.l.b16 %v1060
    %v1093 = vunpack.c.l.b16 %v1061
    %v1094 = vunpack.c.l.b16 %v1062
    %v1095 = vunpack.c.l.b16 %v1063
    %v1096 = vunpack.c.l.b16 %v1064
    %v1097 = vunpack.c.l.b16 %v1065
    %v1098 = vunpack.c.l.b16 %v1066
    %v1099 = vpack.c.b16 %v1084, %v1083
    %v1100 = vpack.c.b16 %v1086, %v1085
    %v1101 = vpack.c.b16 %v1088, %v1087
    %v1102 = vpack.c.b16 %v1090, %v1089
    %v1103 = vpack.c.b16 %v1092, %v1091
    %v1104 = vpack.c.b16 %v1094, %v1093
    %v1105 = vpack.c.b16 %v1096, %v1095
    %v1106 = vpack.c.b16 %v1098, %v1097
    %1115 = vmatprep.subr.bf16.mxu0 0
    %1116 = vmatpush1.bf16.msra.mxu0 %v1099
    %1117 = vmatprep.subr.bf16.mxu0 0
    %1118 = vmatpush1.bf16.msra.mxu0 %v1100
    %1119 = vmatprep.subr.bf16.mxu0 0
    %1120 = vmatpush1.bf16.msra.mxu0 %v1101
    %1121 = vmatprep.subr.bf16.mxu0 0
    %1122 = vmatpush1.bf16.msra.mxu0 %v1102
    %1123 = vmatprep.subr.bf16.mxu0 0
    %1124 = vmatpush1.bf16.msra.mxu0 %v1103
    %1125 = vmatprep.subr.bf16.mxu0 0
    %1126 = vmatpush1.bf16.msra.mxu0 %v1104
    %1127 = vmatprep.subr.bf16.mxu0 0
    %1128 = vmatpush1.bf16.msra.mxu0 %v1105
    %1129 = vmatprep.subr.bf16.mxu0 0
    %1130 = vmatpush1.bf16.msra.mxu0 %v1106
    %1131 = vmatprep.subr.bf16.mxu0 0
    %1132 = vmatpush1.bf16.msra.mxu0 0
    %1133 = vmatprep.subr.bf16.mxu0 0
    %1134 = vmatpush1.bf16.msra.mxu0 0
    %1135 = vmatprep.subr.bf16.mxu0 0
    %1136 = vmatpush1.bf16.msra.mxu0 0
    %1137 = vmatprep.subr.bf16.mxu0 0
    %1138 = vmatpush1.bf16.msra.mxu0 0
    %1139 = vmatprep.subr.bf16.mxu0 0
    %1140 = vmatpush1.bf16.msra.mxu0 0
    %1141 = vmatprep.subr.bf16.mxu0 0
    %1142 = vmatpush1.bf16.msra.mxu0 0
    %1143 = vmatprep.subr.bf16.mxu0 0
    %1144 = vmatpush1.bf16.msra.mxu0 0
    %1145 = vmatprep.subr.bf16.mxu0 0
    %1146 = vmatpush1.bf16.msra.mxu0 0
    %1147 = vmatprep.mubr.bf16.mxu0 0
    %1148 = vmatmul.mubr.bf16.gmra.mrb[0].mxu0 %v1050
    %v1149 = vpop.f32.mrb[0].mxu0
    %v1150 = vadd.f32 0.0, %v1149
    %v1151 = vpop.f32.mrb[0].mxu0
    %v1152 = vpop.f32.mrb[0].mxu0
    %v1153 = vpop.f32.mrb[0].mxu0
    %1154 = vdwg.mxu0
    %v1171 = vunpack.c.l.b16 %v1034
    %v1172 = vunpack.c.l.b16 %v1035
    %v1173 = vunpack.c.l.b16 %v1036
    %v1174 = vunpack.c.l.b16 %v1037
    %v1175 = vunpack.c.l.b16 %v1038
    %v1176 = vunpack.c.l.b16 %v1039
    %v1177 = vunpack.c.l.b16 %v1040
    %v1178 = vunpack.c.l.b16 %v1041
    %v1179 = vunpack.c.l.b16 %v1042
    %v1180 = vunpack.c.l.b16 %v1043
    %v1181 = vunpack.c.l.b16 %v1044
    %v1182 = vunpack.c.l.b16 %v1045
    %v1183 = vunpack.c.l.b16 %v1046
    %v1184 = vunpack.c.l.b16 %v1047
    %v1185 = vunpack.c.l.b16 %v1048
    %v1186 = vunpack.c.l.b16 %v1049
    %v1187 = vpack.c.b16 %v1172, %v1171
    %v1188 = vpack.c.b16 %v1174, %v1173
    %v1189 = vpack.c.b16 %v1176, %v1175
    %v1190 = vpack.c.b16 %v1178, %v1177
    %v1191 = vpack.c.b16 %v1180, %v1179
    %v1192 = vpack.c.b16 %v1182, %v1181
    %v1193 = vpack.c.b16 %v1184, %v1183
    %v1194 = vpack.c.b16 %v1186, %v1185
    %1203 = vmatprep.subr.bf16.mxu0 0
    %1204 = vmatpush1.bf16.msra.mxu0 %v1187
    %1205 = vmatprep.subr.bf16.mxu0 0
    %1206 = vmatpush1.bf16.msra.mxu0 %v1188
    %1207 = vmatprep.subr.bf16.mxu0 0
    %1208 = vmatpush1.bf16.msra.mxu0 %v1189
    %1209 = vmatprep.subr.bf16.mxu0 0
    %1210 = vmatpush1.bf16.msra.mxu0 %v1190
    %1211 = vmatprep.subr.bf16.mxu0 0
    %1212 = vmatpush1.bf16.msra.mxu0 %v1191
    %1213 = vmatprep.subr.bf16.mxu0 0
    %1214 = vmatpush1.bf16.msra.mxu0 %v1192
    %1215 = vmatprep.subr.bf16.mxu0 0
    %1216 = vmatpush1.bf16.msra.mxu0 %v1193
    %1217 = vmatprep.subr.bf16.mxu0 0
    %1218 = vmatpush1.bf16.msra.mxu0 %v1194
    %1219 = vmatprep.subr.bf16.mxu0 0
    %1220 = vmatpush1.bf16.msra.mxu0 0
    %1221 = vmatprep.subr.bf16.mxu0 0
    %1222 = vmatpush1.bf16.msra.mxu0 0
    %1223 = vmatprep.subr.bf16.mxu0 0
    %1224 = vmatpush1.bf16.msra.mxu0 0
    %1225 = vmatprep.subr.bf16.mxu0 0
    %1226 = vmatpush1.bf16.msra.mxu0 0
    %1227 = vmatprep.subr.bf16.mxu0 0
    %1228 = vmatpush1.bf16.msra.mxu0 0
    %1229 = vmatprep.subr.bf16.mxu0 0
    %1230 = vmatpush1.bf16.msra.mxu0 0
    %1231 = vmatprep.subr.bf16.mxu0 0
    %1232 = vmatpush1.bf16.msra.mxu0 0
    %1233 = vmatprep.subr.bf16.mxu0 0
    %1234 = vmatpush1.bf16.msra.mxu0 0
    %1235 = vmatprep.mubr.bf16.mxu0 0
    %1236 = vmatmul.mubr.bf16.gmra.mrb[0].mxu0 %v1033
    %v1237 = vpop.f32.mrb[0].mxu0
    %v1238 = vadd.f32 %v1150, %v1237
    %v1239 = vpop.f32.mrb[0].mxu0
    %v1240 = vpop.f32.mrb[0].mxu0
    %v1241 = vpop.f32.mrb[0].mxu0
    %1242 = vdwg.mxu0
    %v1243 = vld [vmem:[%s13] sm:$0x1]
    %v1245 = vlaneseq
    %v1246 = vshrl.u32 %v1245, 7
    %v1247 = vsub.s32 0, %v1246
    %v1248 = vrot.slane %v1243, %v1247
    %v1250 = vadd.f32 %v1238, %v1248
    %v1251 = vmax.f32 %v1250, 0.0
    %1252 = vst [vmem:[#allocation19] sm:$0xff] %v1251
    // Predicated region
    $region136: #{tpu_custom_call.1} parent=1 // pred_check
      _
    $region137: #{tpu_custom_call.1} parent=1 // pred_check_branch
      %1254 = sbr.rel (0) target = $region139
    $region138: #{tpu_custom_call.1} parent=1 // pred_region
      %s1256 = ssub.s32 128, 128
      %1257 = vsyncadd [#allocation12], %s1256
      %s1259 = sshll.u32 [#allocation19], 4
      %s1260 = int_to_ptr.vmem [resolvable:$true] %s1259
      %1262 = dma.vmem_to_hbm [thread:$0]  %s1260, 128, %s14, [#allocation12]
    $region139: #{tpu_custom_call.1} parent=1 // pred_fallthru
      _
    // Predicated region
    $region140: #{tpu_custom_call.1} parent=1 // pred_check
      _
    $region141: #{tpu_custom_call.1} parent=1 // pred_check_branch
      %1264 = sbr.rel (0) target = $region143
    $region142: #{tpu_custom_call.1} parent=1 // pred_region
      %1265 = dma.done [#allocation12], 128
    $region143: #{tpu_custom_call.1} parent=1 // pred_fallthru
      _
    %1266 = vsyncpa [#allocation11], 1
    %1267 = vsyncpa [#allocation14], 1
    %1268 = vsyncpa [#allocation17], 1
    %1269 = vsyncpa [#allocation12], 1

</llo_original>
